<compile_context>
chip_gen: v5e
topology: v5e:2x2
jax: 0.10.0
libtpu: 0.0.40
codegen_flags: <defaults>
</compile_context>

<pallas_src>
import functools

import numpy as np
import jax
import jax.numpy as jnp
from jax import lax
from jax.experimental import pallas as pl
from jax.experimental.pallas import tpu as pltpu


def _scale_prediction_kernel(x_ref, w1_ref, shift_ref, w2_ref, b2_ref, o_ref,
                             *, TH, use_big_k):
    # x_ref:     (1, H+2, W+2, Cin) bf16   zero-padded image (one batch item);
    #            its block index only depends on b, so it is DMA'd once per
    #            image and reused across the h-strip grid axis.
    # w1_ref:    (9*Cin, Cmid)      bf16   3x3 weights, tap-major, BN folded in.
    # shift_ref: (1, Cmid)          f32    folded conv1 bias + BN shift.
    # w2_ref:    (3, Cmid, nc+5)    bf16   1x1 weights split per anchor.
    # b2_ref:    (3, 1, nc+5)       f32
    # o_ref:     (1, 3, TH*W, nc+5)        strip of the final (permuted) output.
    Wp2 = x_ref.shape[2]
    Cin = x_ref.shape[3]
    W = Wp2 - 2

    h = pl.program_id(1)
    r0 = pl.multiple_of(h * TH, TH)

    # TH output rows plus a one-row halo on each side (the W halo is already in
    # the padded width).  Only the strip is touched, not the full image.
    xs = x_ref[0, pl.ds(r0, TH + 2), :, :]                  # (TH+2, W+2, Cin)

    if use_big_k:
        # Small Cin (9*Cin <= 128): keep one K=9*Cin matmul; the lane concat is
        # tiny and the larger K feeds the MXU better than nine K<=14 dots.
        taps = [xs[ky:ky + TH, kx:kx + W, :]
                for ky in range(3) for kx in range(3)]
        patch = jnp.concatenate(taps, axis=-1).reshape(TH * W, 9 * Cin)
        h1 = jnp.dot(patch, w1_ref[...], preferred_element_type=jnp.float32)
    else:
        # 9 accumulating dots: no lane-axis concat / big im2col reshape, so the
        # XLU/VPU relayout work of the previous version disappears.
        h1 = None
        for ky in range(3):
            for kx in range(3):
                t = ky * 3 + kx
                tap = xs[ky:ky + TH, kx:kx + W, :].reshape(TH * W, Cin)
                d = jnp.dot(tap, w1_ref[t * Cin:(t + 1) * Cin, :],
                            preferred_element_type=jnp.float32)
                h1 = d if h1 is None else h1 + d

    h1 = h1 + shift_ref[...]                                # folded bias + BN
    h1 = jnp.maximum(h1, 0.1 * h1)                          # LeakyReLU(0.1), f32
    h1b = h1.astype(jnp.bfloat16)

    # 1x1 conv: one row-major dot per anchor.  No transposed operand, and the
    # results land directly in the (anchor, pixel, nc+5) layout of the final
    # permuted output, so the wrapper never re-reads the output from HBM.
    for a in range(3):
        o_ref[0, a, :, :] = (
            jnp.dot(h1b, w2_ref[a], preferred_element_type=jnp.float32)
            + b2_ref[a]).astype(o_ref.dtype)


def _pick_strip_rows(H, W, target_rows=1024):
    """Largest TH dividing H with TH*W <= target_rows, preferring aligned rows."""
    divs = [d for d in range(1, H + 1) if H % d == 0]
    for pred in (lambda d: (d * W) % 128 == 0,     # lane-dense row count
                 lambda d: (d * W) % 8 == 0,       # sublane-aligned row count
                 lambda d: d == H):                # full-height fallback
        cand = [d for d in divs if pred(d)]
        if cand:
            fit = [d for d in cand if d * W <= target_rows]
            return max(fit) if fit else min(cand)
    return H


def scale_prediction(x_nchw, w1, b1, gamma, beta, rmean, rvar, w2, b2,
                     num_classes, *, eps=1e-5, strip_rows=None,
                     out_dtype=jnp.float32):
    """x_nchw: (B, Cin, H, W) f32.  Returns (B, 3, H, W, num_classes+5)."""
    B, Cin, H, W = x_nchw.shape
    Cmid = w1.shape[-1]               # w1: (3, 3, Cin, Cmid)
    Cout = w2.shape[-1]               # w2: (Cmid, Cout) = (Cmid, 3*(nc+5))
    npl5 = num_classes + 5
    assert Cout == 3 * npl5

    TH = _pick_strip_rows(H, W) if strip_rows is None else min(strip_rows, H)
    assert H % TH == 0, "H must be divisible by the strip height"
    assert (TH * W) % 8 == 0 or TH == H, \
        "strip must keep the output block sublane-aligned"

    use_big_k = (9 * Cin) <= 128

    # ---- parameter setup / folding (plain XLA glue, done once) -------------
    scale = gamma / jnp.sqrt(rvar + eps)                          # (Cmid,)
    w1f = (w1 * scale).reshape(9 * Cin, Cmid).astype(jnp.bfloat16)
    shift = ((b1 - rmean) * scale + beta).reshape(1, Cmid).astype(jnp.float32)
    w2r = jnp.transpose(w2.reshape(Cmid, 3, npl5),
                        (1, 0, 2)).astype(jnp.bfloat16)           # (3,Cmid,nc+5)
    b2r = b2.reshape(3, 1, npl5).astype(jnp.float32)

    # TODO(synk): move this NHWC relayout + pad + cast into the kernel
    # (NCHW pl.ANY input with manual halo-strip DMA) to remove the remaining
    # input-side HBM passes.
    x_pad = jnp.pad(jnp.transpose(x_nchw, (0, 2, 3, 1)),
                    ((0, 0), (1, 1), (1, 1), (0, 0))).astype(jnp.bfloat16)

    flops = 2 * B * H * W * (9 * Cin * Cmid + Cmid * Cout)
    out_bytes = B * 3 * H * W * npl5 * np.dtype(out_dtype).itemsize
    bytes_accessed = int(x_pad.size * 2 + w1f.size * 2 + w2r.size * 2
                         + shift.size * 4 + b2r.size * 4 + out_bytes)

    out = pl.pallas_call(
        functools.partial(_scale_prediction_kernel, TH=TH, use_big_k=use_big_k),
        out_shape=jax.ShapeDtypeStruct((B, 3, H * W, npl5), out_dtype),
        grid_spec=pltpu.PrefetchScalarGridSpec(
            num_scalar_prefetch=0,
            grid=(B, H // TH),
            in_specs=[
                pl.BlockSpec((1, H + 2, W + 2, Cin), lambda b, h: (b, 0, 0, 0)),
                pl.BlockSpec((9 * Cin, Cmid), lambda b, h: (0, 0)),
                pl.BlockSpec((1, Cmid), lambda b, h: (0, 0)),
                pl.BlockSpec((3, Cmid, npl5), lambda b, h: (0, 0, 0)),
                pl.BlockSpec((3, 1, npl5), lambda b, h: (0, 0, 0)),
            ],
            out_specs=pl.BlockSpec((1, 3, TH * W, npl5),
                                   lambda b, h: (b, 0, h, 0)),
        ),
        compiler_params=pltpu.CompilerParams(
            # Batch axis parallel only: on v7x the two cores then never DMA the
            # same whole-image input block redundantly (h is "arbitrary").
            dimension_semantics=("parallel", "arbitrary"),
            vmem_limit_bytes=32 * 1024 * 1024),
        cost_estimate=pl.CostEstimate(flops=flops, transcendentals=0,
                                      bytes_accessed=bytes_accessed),
    )(x_pad, w1f, shift, w2r, b2r)

    # (B, 3, H*W, nc+5) is already the permuted layout: the PyTorch
    # view + permute(0, 1, 3, 4, 2) is now a free reshape.
    return out.reshape(B, 3, H, W, npl5)


def scale_prediction_ref(x_nchw, w1, b1, gamma, beta, rmean, rvar, w2, b2,
                         num_classes, eps=1e-5):
    """Plain-JAX f32 reference reproducing the PyTorch forward (eval-mode BN)."""
    B, Cin, H, W = x_nchw.shape
    w1_oihw = jnp.transpose(w1, (3, 2, 0, 1))          # (kh,kw,Cin,Cmid)->OIHW
    y = lax.conv_general_dilated(x_nchw, w1_oihw, (1, 1),
                                 ((1, 1), (1, 1)),
                                 dimension_numbers=("NCHW", "OIHW", "NCHW"))
    y = y + b1[None, :, None, None]
    scale = gamma / jnp.sqrt(rvar + eps)
    shift = beta - rmean * scale
    y = y * scale[None, :, None, None] + shift[None, :, None, None]
    y = jnp.where(y > 0, y, 0.1 * y)
    w2_oihw = jnp.transpose(w2, (1, 0))[:, :, None, None]
    z = lax.conv_general_dilated(y, w2_oihw, (1, 1), ((0, 0), (0, 0)),
                                 dimension_numbers=("NCHW", "OIHW", "NCHW"))
    z = z + b2[None, :, None, None]
    z = z.reshape(B, 3, num_classes + 5, H, W)
    return jnp.transpose(z, (0, 1, 3, 4, 2))


if __name__ == "__main__":
    def run_case(B, Cin, H, W, num_classes):
        Cmid = 2 * Cin
        Cout = 3 * (num_classes + 5)
        key = jax.random.PRNGKey(0)
        kx, *ks = jax.random.split(key, 9)
        x = jax.random.normal(kx, (B, Cin, H, W), jnp.float32)
        w1 = 0.1 * jax.random.normal(ks[0], (3, 3, Cin, Cmid), jnp.float32)
        b1 = 0.1 * jax.random.normal(ks[1], (Cmid,), jnp.float32)
        gamma = 1.0 + 0.1 * jax.random.normal(ks[2], (Cmid,), jnp.float32)
        beta = 0.1 * jax.random.normal(ks[3], (Cmid,), jnp.float32)
        rmean = 0.1 * jax.random.normal(ks[4], (Cmid,), jnp.float32)
        rvar = jnp.abs(1.0 + 0.1 * jax.random.normal(ks[5], (Cmid,), jnp.float32))
        w2 = 0.1 * jax.random.normal(ks[6], (Cmid, Cout), jnp.float32)
        b2 = 0.1 * jax.random.normal(ks[7], (Cout,), jnp.float32)

        out = jax.block_until_ready(
            scale_prediction(x, w1, b1, gamma, beta, rmean, rvar, w2, b2,
                             num_classes))
        assert out.shape == (B, 3, H, W, num_classes + 5), out.shape

        ref = jax.block_until_ready(
            scale_prediction_ref(x, w1, b1, gamma, beta, rmean, rvar, w2, b2,
                                 num_classes))
        # bf16 activations/weights with f32 accumulation -> compare the max
        # error normalized by the reference magnitude.
        err = float(jnp.max(jnp.abs(out - ref))
                    / (jnp.max(jnp.abs(ref)) + 1e-6))
        assert err < 2e-2, err

    # Exercises the big-K (9*Cin <= 128) conv1 path.
    run_case(B=2, Cin=4, H=16, W=16, num_classes=3)
    # Exercises the 9-accumulating-dot conv1 path (9*Cin > 128).
    run_case(B=1, Cin=32, H=16, W=16, num_classes=3)

    print("KERNEL_OK")
</pallas_src>

<mosaic_0001>
module attributes {stable_mosaic.version = 11 : i64} {
  func.func @_scale_prediction_kernel(%arg0: i32, %arg1: i32, %arg2: memref<1x18x18x4xbf16, #tpu.memory_space<vmem>>, %arg3: memref<36x8xbf16, #tpu.memory_space<vmem>>, %arg4: memref<1x8xf32, #tpu.memory_space<vmem>>, %arg5: memref<3x8x8xbf16, #tpu.memory_space<vmem>>, %arg6: memref<3x1x8xf32, #tpu.memory_space<vmem>>, %arg7: memref<1x3x256x8xf32, #tpu.memory_space<vmem>>) attributes {dimension_semantics = [#tpu.dimension_semantics<parallel>, #tpu.dimension_semantics<arbitrary>], iteration_bounds = array<i64: 2, 1>, scalar_prefetch = 0 : i64, scratch_operands = 0 : i64, tpu.core_type = #tpu.core_type<tc>, window_params = [{transform_indices = @transform_0, window_bounds = array<i64: 1, 18, 18, 4>}, {pipeline_mode = #tpu.pipeline_mode<synchronous>, transform_indices = @transform_1, window_bounds = array<i64: 36, 8>}, {pipeline_mode = #tpu.pipeline_mode<synchronous>, transform_indices = @transform_2, window_bounds = array<i64: 1, 8>}, {pipeline_mode = #tpu.pipeline_mode<synchronous>, transform_indices = @transform_3, window_bounds = array<i64: 3, 8, 8>}, {pipeline_mode = #tpu.pipeline_mode<synchronous>, transform_indices = @transform_4, window_bounds = array<i64: 3, 1, 8>}, {transform_indices = @transform_5, window_bounds = array<i64: 1, 3, 256, 8>}]} {
    %c16_i32 = arith.constant 16 : i32
    %0 = arith.muli %arg1, %c16_i32 : i32
    %1 = tpu.assume_multiple %0, 16 : i32
    %c0 = arith.constant 0 : index
    %2 = arith.index_cast %1 : i32 to index
    %c0_0 = arith.constant 0 : index
    %c0_1 = arith.constant 0 : index
    %3 = vector.load %arg2[%c0, %2, %c0_0, %c0_1] : memref<1x18x18x4xbf16, #tpu.memory_space<vmem>>, vector<1x18x18x4xbf16>
    %4 = vector.shape_cast %3 : vector<1x18x18x4xbf16> to vector<18x18x4xbf16>
    %5 = vector.extract_strided_slice %4 {offsets = [0, 0, 0], sizes = [16, 16, 4], strides = [1, 1, 1]} : vector<18x18x4xbf16> to vector<16x16x4xbf16>
    %6 = vector.extract_strided_slice %4 {offsets = [0, 1, 0], sizes = [16, 16, 4], strides = [1, 1, 1]} : vector<18x18x4xbf16> to vector<16x16x4xbf16>
    %7 = vector.extract_strided_slice %4 {offsets = [0, 2, 0], sizes = [16, 16, 4], strides = [1, 1, 1]} : vector<18x18x4xbf16> to vector<16x16x4xbf16>
    %8 = vector.extract_strided_slice %4 {offsets = [1, 0, 0], sizes = [16, 16, 4], strides = [1, 1, 1]} : vector<18x18x4xbf16> to vector<16x16x4xbf16>
    %9 = vector.extract_strided_slice %4 {offsets = [1, 1, 0], sizes = [16, 16, 4], strides = [1, 1, 1]} : vector<18x18x4xbf16> to vector<16x16x4xbf16>
    %10 = vector.extract_strided_slice %4 {offsets = [1, 2, 0], sizes = [16, 16, 4], strides = [1, 1, 1]} : vector<18x18x4xbf16> to vector<16x16x4xbf16>
    %11 = vector.extract_strided_slice %4 {offsets = [2, 0, 0], sizes = [16, 16, 4], strides = [1, 1, 1]} : vector<18x18x4xbf16> to vector<16x16x4xbf16>
    %12 = vector.extract_strided_slice %4 {offsets = [2, 1, 0], sizes = [16, 16, 4], strides = [1, 1, 1]} : vector<18x18x4xbf16> to vector<16x16x4xbf16>
    %13 = vector.extract_strided_slice %4 {offsets = [2, 2, 0], sizes = [16, 16, 4], strides = [1, 1, 1]} : vector<18x18x4xbf16> to vector<16x16x4xbf16>
    %14 = tpu.concatenate %5, %6, %7, %8, %9, %10, %11, %12, %13 in 2 : vector<16x16x4xbf16>, vector<16x16x4xbf16>, vector<16x16x4xbf16>, vector<16x16x4xbf16>, vector<16x16x4xbf16>, vector<16x16x4xbf16>, vector<16x16x4xbf16>, vector<16x16x4xbf16>, vector<16x16x4xbf16> -> vector<16x16x36xbf16>
    %15 = vector.shape_cast %14 : vector<16x16x36xbf16> to vector<256x36xbf16>
    %c0_2 = arith.constant 0 : index
    %c0_3 = arith.constant 0 : index
    %16 = vector.load %arg3[%c0_2, %c0_3] : memref<36x8xbf16, #tpu.memory_space<vmem>>, vector<36x8xbf16>
    %cst = arith.constant dense<0.000000e+00> : vector<256x8xf32>
    %17 = tpu.matmul %15, %16, %cst {dimension_numbers = #tpu.dot_dimension_numbers<[1], [0], [0], [1], [0, 0, 1, 1], [], []>} : vector<256x36xbf16>, vector<36x8xbf16>, vector<256x8xf32> -> vector<256x8xf32>
    %c0_4 = arith.constant 0 : index
    %c0_5 = arith.constant 0 : index
    %18 = vector.load %arg4[%c0_4, %c0_5] : memref<1x8xf32, #tpu.memory_space<vmem>>, vector<1x8xf32>
    %19 = vector.broadcast %18 : vector<1x8xf32> to vector<256x8xf32>
    %20 = arith.addf %17, %19 : vector<256x8xf32>
    %cst_6 = arith.constant 1.000000e-01 : f32
    %21 = vector.broadcast %cst_6 : f32 to vector<256x8xf32>
    %22 = arith.mulf %21, %20 : vector<256x8xf32>
    %23 = arith.maximumf %20, %22 : vector<256x8xf32>
    %24 = arith.truncf %23 : vector<256x8xf32> to vector<256x8xbf16>
    %c0_7 = arith.constant 0 : index
    %c0_8 = arith.constant 0 : index
    %c0_9 = arith.constant 0 : index
    %25 = vector.load %arg5[%c0_7, %c0_8, %c0_9] : memref<3x8x8xbf16, #tpu.memory_space<vmem>>, vector<1x8x8xbf16>
    %26 = vector.shape_cast %25 : vector<1x8x8xbf16> to vector<8x8xbf16>
    %cst_10 = arith.constant dense<0.000000e+00> : vector<256x8xf32>
    %27 = tpu.matmul %24, %26, %cst_10 {dimension_numbers = #tpu.dot_dimension_numbers<[1], [0], [0], [1], [0, 0, 1, 1], [], []>} : vector<256x8xbf16>, vector<8x8xbf16>, vector<256x8xf32> -> vector<256x8xf32>
    %c0_11 = arith.constant 0 : index
    %c0_12 = arith.constant 0 : index
    %c0_13 = arith.constant 0 : index
    %28 = vector.load %arg6[%c0_11, %c0_12, %c0_13] : memref<3x1x8xf32, #tpu.memory_space<vmem>>, vector<1x1x8xf32>
    %29 = vector.shape_cast %28 : vector<1x1x8xf32> to vector<1x8xf32>
    %30 = vector.broadcast %29 : vector<1x8xf32> to vector<256x8xf32>
    %31 = arith.addf %27, %30 : vector<256x8xf32>
    %c0_14 = arith.constant 0 : index
    %c0_15 = arith.constant 0 : index
    %c0_16 = arith.constant 0 : index
    %c0_17 = arith.constant 0 : index
    %32 = vector.load %arg7[%c0_14, %c0_15, %c0_16, %c0_17] : memref<1x3x256x8xf32, #tpu.memory_space<vmem>>, vector<1x1x256x8xf32>
    %33 = vector.shape_cast %32 : vector<1x1x256x8xf32> to vector<256x8xf32>
    %34 = vector.shape_cast %31 : vector<256x8xf32> to vector<1x1x256x8xf32>
    tpu.vector_store %arg7[%c0_14, %c0_15, %c0_16, %c0_17], %34 {strides = array<i32>} : memref<1x3x256x8xf32, #tpu.memory_space<vmem>>, vector<1x1x256x8xf32>,
    %c1 = arith.constant 1 : index
    %c0_18 = arith.constant 0 : index
    %c0_19 = arith.constant 0 : index
    %35 = vector.load %arg5[%c1, %c0_18, %c0_19] : memref<3x8x8xbf16, #tpu.memory_space<vmem>>, vector<1x8x8xbf16>
    %36 = vector.shape_cast %35 : vector<1x8x8xbf16> to vector<8x8xbf16>
    %cst_20 = arith.constant dense<0.000000e+00> : vector<256x8xf32>
    %37 = tpu.matmul %24, %36, %cst_20 {dimension_numbers = #tpu.dot_dimension_numbers<[1], [0], [0], [1], [0, 0, 1, 1], [], []>} : vector<256x8xbf16>, vector<8x8xbf16>, vector<256x8xf32> -> vector<256x8xf32>
    %c1_21 = arith.constant 1 : index
    %c0_22 = arith.constant 0 : index
    %c0_23 = arith.constant 0 : index
    %38 = vector.load %arg6[%c1_21, %c0_22, %c0_23] : memref<3x1x8xf32, #tpu.memory_space<vmem>>, vector<1x1x8xf32>
    %39 = vector.shape_cast %38 : vector<1x1x8xf32> to vector<1x8xf32>
    %40 = vector.broadcast %39 : vector<1x8xf32> to vector<256x8xf32>
    %41 = arith.addf %37, %40 : vector<256x8xf32>
    %c0_24 = arith.constant 0 : index
    %c1_25 = arith.constant 1 : index
    %c0_26 = arith.constant 0 : index
    %c0_27 = arith.constant 0 : index
    %42 = vector.load %arg7[%c0_24, %c1_25, %c0_26, %c0_27] : memref<1x3x256x8xf32, #tpu.memory_space<vmem>>, vector<1x1x256x8xf32>
    %43 = vector.shape_cast %42 : vector<1x1x256x8xf32> to vector<256x8xf32>
    %44 = vector.shape_cast %41 : vector<256x8xf32> to vector<1x1x256x8xf32>
    tpu.vector_store %arg7[%c0_24, %c1_25, %c0_26, %c0_27], %44 {strides = array<i32>} : memref<1x3x256x8xf32, #tpu.memory_space<vmem>>, vector<1x1x256x8xf32>,
    %c2 = arith.constant 2 : index
    %c0_28 = arith.constant 0 : index
    %c0_29 = arith.constant 0 : index
    %45 = vector.load %arg5[%c2, %c0_28, %c0_29] : memref<3x8x8xbf16, #tpu.memory_space<vmem>>, vector<1x8x8xbf16>
    %46 = vector.shape_cast %45 : vector<1x8x8xbf16> to vector<8x8xbf16>
    %cst_30 = arith.constant dense<0.000000e+00> : vector<256x8xf32>
    %47 = tpu.matmul %24, %46, %cst_30 {dimension_numbers = #tpu.dot_dimension_numbers<[1], [0], [0], [1], [0, 0, 1, 1], [], []>} : vector<256x8xbf16>, vector<8x8xbf16>, vector<256x8xf32> -> vector<256x8xf32>
    %c2_31 = arith.constant 2 : index
    %c0_32 = arith.constant 0 : index
    %c0_33 = arith.constant 0 : index
    %48 = vector.load %arg6[%c2_31, %c0_32, %c0_33] : memref<3x1x8xf32, #tpu.memory_space<vmem>>, vector<1x1x8xf32>
    %49 = vector.shape_cast %48 : vector<1x1x8xf32> to vector<1x8xf32>
    %50 = vector.broadcast %49 : vector<1x8xf32> to vector<256x8xf32>
    %51 = arith.addf %47, %50 : vector<256x8xf32>
    %c0_34 = arith.constant 0 : index
    %c2_35 = arith.constant 2 : index
    %c0_36 = arith.constant 0 : index
    %c0_37 = arith.constant 0 : index
    %52 = vector.load %arg7[%c0_34, %c2_35, %c0_36, %c0_37] : memref<1x3x256x8xf32, #tpu.memory_space<vmem>>, vector<1x1x256x8xf32>
    %53 = vector.shape_cast %52 : vector<1x1x256x8xf32> to vector<256x8xf32>
    %54 = vector.shape_cast %51 : vector<256x8xf32> to vector<1x1x256x8xf32>
    tpu.vector_store %arg7[%c0_34, %c2_35, %c0_36, %c0_37], %54 {strides = array<i32>} : memref<1x3x256x8xf32, #tpu.memory_space<vmem>>, vector<1x1x256x8xf32>,
    return
  }
  func.func @transform_0(%arg0: i32, %arg1: i32) -> (i32, i32, i32, i32) {
    %c0_i32 = arith.constant 0 : i32
    %c0_i32_0 = arith.constant 0 : i32
    %c0_i32_1 = arith.constant 0 : i32
    %c0_i32_2 = arith.constant 0 : i32
    return %arg0, %c0_i32, %c0_i32_0, %c0_i32_1 : i32, i32, i32, i32
  }
  func.func @transform_1(%arg0: i32, %arg1: i32) -> (i32, i32) {
    %c0_i32 = arith.constant 0 : i32
    %c0_i32_0 = arith.constant 0 : i32
    %c0_i32_1 = arith.constant 0 : i32
    return %c0_i32, %c0_i32_0 : i32, i32
  }
  func.func @transform_2(%arg0: i32, %arg1: i32) -> (i32, i32) {
    %c0_i32 = arith.constant 0 : i32
    %c0_i32_0 = arith.constant 0 : i32
    %c0_i32_1 = arith.constant 0 : i32
    return %c0_i32, %c0_i32_0 : i32, i32
  }
  func.func @transform_3(%arg0: i32, %arg1: i32) -> (i32, i32, i32) {
    %c0_i32 = arith.constant 0 : i32
    %c0_i32_0 = arith.constant 0 : i32
    %c0_i32_1 = arith.constant 0 : i32
    %c0_i32_2 = arith.constant 0 : i32
    return %c0_i32, %c0_i32_0, %c0_i32_1 : i32, i32, i32
  }
  func.func @transform_4(%arg0: i32, %arg1: i32) -> (i32, i32, i32) {
    %c0_i32 = arith.constant 0 : i32
    %c0_i32_0 = arith.constant 0 : i32
    %c0_i32_1 = arith.constant 0 : i32
    %c0_i32_2 = arith.constant 0 : i32
    return %c0_i32, %c0_i32_0, %c0_i32_1 : i32, i32, i32
  }
  func.func @transform_5(%arg0: i32, %arg1: i32) -> (i32, i32, i32, i32) {
    %c0_i32 = arith.constant 0 : i32
    %c0_i32_0 = arith.constant 0 : i32
    %c0_i32_1 = arith.constant 0 : i32
    return %arg0, %c0_i32, %arg1, %c0_i32_0 : i32, i32, i32, i32
  }
}

</mosaic_0001>

<llo_original>
// kernel: tpu_custom_call.1
$region0: #{tpu_custom_call.1}
  #allocation0 [shape = 'u32[]', space=smem, size = 0x4, offset = 0x4, fixed_abs, tag = 'smem constant byte address 0x4 - core index']
  #allocation1 [shape = 'u32[72,128]{1,0:T(1,128)}', space=vmem, size = 0x9000, scoped, tag = 'internal scratch']
  %s0 = inlined_call_operand.vmem [shape: bf16[2,18,18,4], index: 0, kind: input, shape index: {}]
  %s1 = inlined_call_operand.vmem [shape: bf16[36,8], index: 1, kind: input, shape index: {}]
  %s2 = inlined_call_operand.vmem [shape: f32[1,8], index: 2, kind: input, shape index: {}]
  %s3 = inlined_call_operand.vmem [shape: bf16[3,8,8], index: 3, kind: input, shape index: {}]
  %s4 = inlined_call_operand.vmem [shape: f32[3,1,8], index: 4, kind: input, shape index: {}]
  %s5 = inlined_call_operand.vmem [shape: f32[2,3,256,8], index: 5, kind: output, shape index: {}]
  %s6 = sld [smem:[#allocation0]]
  $region53: #{tpu_custom_call.1} parent=0
    _
  %s8 = ssub.s32 1, %s6
  %s9 = scalar_select 0, %s8, %s6
  loop: start=0, step=1, limit=4
  $region2: #{tpu_custom_call.1} parent=0 // loop_pre_header
    _
  $region3: #{tpu_custom_call.1} parent=0 // loop_header
    %s11 = sphi 0, %s15
    %p12 = scmp.ge.s32.totalorder %s11, 4
    %s18 = sphi 0, %s30
    %s19 = sphi 0, %s26
    %s20 = sphi 0, %s18
    %s21 = sphi 0, %s19
    %s22 = sphi 0, %s20
    %s23 = sphi 0, %s21
    %s33 = sphi 0, %s35
    %s36 = sphi 0, %s33
    %s37 = sphi 0, %s36
    %s53 = sphi 0, %s37
    %s57 = sphi 0, %s57
    %s59 = sphi 0, %s57
    %s60 = sphi 0, %s59
    %s74 = sphi 0, %s60
    %s78 = sphi 0, %s78
    %s80 = sphi 0, %s78
    %s81 = sphi 0, %s80
    %s95 = sphi 0, %s81
    %s99 = sphi 0, %s99
    %s101 = sphi 0, %s99
    %s102 = sphi 0, %s101
    %s116 = sphi 0, %s102
    %s120 = sphi 0, %s120
    %s122 = sphi 0, %s120
    %s123 = sphi 0, %s122
    %s137 = sphi 0, %s123
    %s145 = sphi 0, %s147
    %s148 = sphi 0, %s145
    %s149 = sphi 0, %s148
    %s165 = sphi 0, %s149
  $region4: #{tpu_custom_call.1} parent=0 // loop_header_branch
    %14 = sbr.rel (%p12) target = $region8
  $region5: #{tpu_custom_call.1} parent=0 // loop_body
    %s16 = ssub.s32 %s11, 1
    %s17 = ssub.s32 %s11, 2
    %s24 = sadd.s32 1, %s19
    %p25 = scmp.ge.s32.totalorder %s24, 1
    %s26 = scalar_select %p25, 0, %s24
    %s27 = sadd.s32 1, %s18
    %s28 = scalar_select %p25, %s27, %s18
    %p29 = scmp.ge.s32.totalorder %s28, 2
    %s30 = scalar_select %p29, 0, %s28
    %s31 = ssub.s32 %s18, %s30
    %p32 = scmp.eq.s32.totalorder %s31, 0
    %s34 = sadd.s32 %s33, 1
    %s35 = scalar_select %p32, %s33, %s34
    %p38 = pneg %p32
    %p39 = scmp.eq.s32.totalorder %s11, 1
    %p40 = por %p38, %p39
    %p41 = scmp.ne.s32.totalorder %s33, %s36
    %p42 = scmp.eq.s32.totalorder %s11, 0
    %p43 = por %p41, %p42
    %p44 = scmp.ne.s32.totalorder %s33, %s36
    %p45 = scmp.eq.s32.totalorder %s16, 1
    %p46 = por %p44, %p45
    %p47 = scmp.ne.s32.totalorder %s36, %s37
    %p48 = scmp.eq.s32.totalorder %s16, 0
    %p49 = por %p47, %p48
    %p50 = scmp.ne.s32.totalorder %s36, %s37
    %p51 = scmp.eq.s32.totalorder %s17, 1
    %p52 = por %p50, %p51
    %p54 = scmp.ne.s32.totalorder %s37, %s53
    %p55 = scmp.eq.s32.totalorder %s17, 0
    %p56 = por %p54, %p55
    %s58 = sadd.s32 %s57, 1
    %p61 = scmp.eq.s32.totalorder %s11, 1
    %p62 = scmp.ne.s32.totalorder %s57, %s59
    %p63 = scmp.eq.s32.totalorder %s11, 0
    %p64 = por %p62, %p63
    %p65 = scmp.ne.s32.totalorder %s57, %s59
    %p66 = scmp.eq.s32.totalorder %s16, 1
    %p67 = por %p65, %p66
    %p68 = scmp.ne.s32.totalorder %s59, %s60
    %p69 = scmp.eq.s32.totalorder %s16, 0
    %p70 = por %p68, %p69
    %p71 = scmp.ne.s32.totalorder %s59, %s60
    %p72 = scmp.eq.s32.totalorder %s17, 1
    %p73 = por %p71, %p72
    %p75 = scmp.ne.s32.totalorder %s60, %s74
    %p76 = scmp.eq.s32.totalorder %s17, 0
    %p77 = por %p75, %p76
    %s79 = sadd.s32 %s78, 1
    %p82 = scmp.eq.s32.totalorder %s11, 1
    %p83 = scmp.ne.s32.totalorder %s78, %s80
    %p84 = scmp.eq.s32.totalorder %s11, 0
    %p85 = por %p83, %p84
    %p86 = scmp.ne.s32.totalorder %s78, %s80
    %p87 = scmp.eq.s32.totalorder %s16, 1
    %p88 = por %p86, %p87
    %p89 = scmp.ne.s32.totalorder %s80, %s81
    %p90 = scmp.eq.s32.totalorder %s16, 0
    %p91 = por %p89, %p90
    %p92 = scmp.ne.s32.totalorder %s80, %s81
    %p93 = scmp.eq.s32.totalorder %s17, 1
    %p94 = por %p92, %p93
    %p96 = scmp.ne.s32.totalorder %s81, %s95
    %p97 = scmp.eq.s32.totalorder %s17, 0
    %p98 = por %p96, %p97
    %s100 = sadd.s32 %s99, 1
    %p103 = scmp.eq.s32.totalorder %s11, 1
    %p104 = scmp.ne.s32.totalorder %s99, %s101
    %p105 = scmp.eq.s32.totalorder %s11, 0
    %p106 = por %p104, %p105
    %p107 = scmp.ne.s32.totalorder %s99, %s101
    %p108 = scmp.eq.s32.totalorder %s16, 1
    %p109 = por %p107, %p108
    %p110 = scmp.ne.s32.totalorder %s101, %s102
    %p111 = scmp.eq.s32.totalorder %s16, 0
    %p112 = por %p110, %p111
    %p113 = scmp.ne.s32.totalorder %s101, %s102
    %p114 = scmp.eq.s32.totalorder %s17, 1
    %p115 = por %p113, %p114
    %p117 = scmp.ne.s32.totalorder %s102, %s116
    %p118 = scmp.eq.s32.totalorder %s17, 0
    %p119 = por %p117, %p118
    %s121 = sadd.s32 %s120, 1
    %p124 = scmp.eq.s32.totalorder %s11, 1
    %p125 = scmp.ne.s32.totalorder %s120, %s122
    %p126 = scmp.eq.s32.totalorder %s11, 0
    %p127 = por %p125, %p126
    %p128 = scmp.ne.s32.totalorder %s120, %s122
    %p129 = scmp.eq.s32.totalorder %s16, 1
    %p130 = por %p128, %p129
    %p131 = scmp.ne.s32.totalorder %s122, %s123
    %p132 = scmp.eq.s32.totalorder %s16, 0
    %p133 = por %p131, %p132
    %p134 = scmp.ne.s32.totalorder %s122, %s123
    %p135 = scmp.eq.s32.totalorder %s17, 1
    %p136 = por %p134, %p135
    %p138 = scmp.ne.s32.totalorder %s123, %s137
    %p139 = scmp.eq.s32.totalorder %s17, 0
    %p140 = por %p138, %p139
    %s141 = ssub.s32 %s18, %s30
    %s142 = ssub.s32 %s19, %s26
    %s143 = sor.u32 %s141, %s142
    %p144 = scmp.eq.s32.totalorder %s143, 0
    %s146 = sadd.s32 %s145, 1
    %s147 = scalar_select %p144, %s145, %s146
    %p150 = pneg %p144
    %p151 = scmp.eq.s32.totalorder %s11, 1
    %p152 = por %p150, %p151
    %p153 = scmp.ne.s32.totalorder %s145, %s148
    %p154 = scmp.eq.s32.totalorder %s11, 0
    %p155 = por %p153, %p154
    %p156 = scmp.ne.s32.totalorder %s145, %s148
    %p157 = scmp.eq.s32.totalorder %s16, 1
    %p158 = por %p156, %p157
    %p159 = scmp.ne.s32.totalorder %s148, %s149
    %p160 = scmp.eq.s32.totalorder %s16, 0
    %p161 = por %p159, %p160
    %p162 = scmp.ne.s32.totalorder %s148, %s149
    %p163 = scmp.eq.s32.totalorder %s17, 1
    %p164 = por %p162, %p163
    %p166 = scmp.ne.s32.totalorder %s149, %s165
    %p167 = scmp.eq.s32.totalorder %s17, 0
    %p168 = por %p166, %p167
    %p169 = scmp.le.s32.totalorder 1, %s11
    %p170 = scmp.lt.s32.totalorder %s11, 3
    %p171 = pnand %p169, %p170
    %p172 = pneg %p171
    // Predicated region
    $region9: #{tpu_custom_call.1} parent=5 // pred_check
      _
    $region10: #{tpu_custom_call.1} parent=5 // pred_check_branch
      %174 = sbr.rel (%p171) target = $region12
    $region11: #{tpu_custom_call.1} parent=5 // pred_region
      %s175 = ssub.s32 %s11, 1
      // Predicated region
      $region13: #{tpu_custom_call.1} parent=11 // pred_check
        %p176 = pneg %p70
      $region14: #{tpu_custom_call.1} parent=11 // pred_check_branch
        %178 = sbr.rel (%p176) target = $region16
      $region15: #{tpu_custom_call.1} parent=11 // pred_region
        _
      $region16: #{tpu_custom_call.1} parent=11 // pred_fallthru
        _
      // Predicated region
      $region17: #{tpu_custom_call.1} parent=11 // pred_check
        %p179 = pneg %p91
      $region18: #{tpu_custom_call.1} parent=11 // pred_check_branch
        %181 = sbr.rel (%p179) target = $region20
      $region19: #{tpu_custom_call.1} parent=11 // pred_region
        _
      $region20: #{tpu_custom_call.1} parent=11 // pred_fallthru
        _
      // Predicated region
      $region21: #{tpu_custom_call.1} parent=11 // pred_check
        %p182 = pneg %p112
      $region22: #{tpu_custom_call.1} parent=11 // pred_check_branch
        %184 = sbr.rel (%p182) target = $region24
      $region23: #{tpu_custom_call.1} parent=11 // pred_region
        _
      $region24: #{tpu_custom_call.1} parent=11 // pred_fallthru
        _
      // Predicated region
      $region25: #{tpu_custom_call.1} parent=11 // pred_check
        %p185 = pneg %p133
      $region26: #{tpu_custom_call.1} parent=11 // pred_check_branch
        %187 = sbr.rel (%p185) target = $region28
      $region27: #{tpu_custom_call.1} parent=11 // pred_region
        _
      $region28: #{tpu_custom_call.1} parent=11 // pred_fallthru
        _
    $region12: #{tpu_custom_call.1} parent=5 // pred_fallthru
      _
    %p188 = scmp.lt.s32.totalorder %s11, 2
    // Predicated region
    $region29: #{tpu_custom_call.1} parent=5 // pred_check
      %p189 = pneg %p188
    $region30: #{tpu_custom_call.1} parent=5 // pred_check_branch
      %191 = sbr.rel (%p189) target = $region32
    $region31: #{tpu_custom_call.1} parent=5 // pred_region
      // Predicated region
      $region33: #{tpu_custom_call.1} parent=31 // pred_check
        %p192 = pneg %p43
      $region34: #{tpu_custom_call.1} parent=31 // pred_check_branch
        %194 = sbr.rel (%p192) target = $region36
      $region35: #{tpu_custom_call.1} parent=31 // pred_region
        %p195 = scmp.lt.s32.totalorder %s18, 1
        %s196 = scalar_select %p195, %s18, 1
        %s197 = smul.addr %s196, 54
        %s198 = smul.addr %s197, 4
        %s199 = scalar_lea.vmem %s0, %s198
      $region36: #{tpu_custom_call.1} parent=31 // pred_fallthru
        _
    $region32: #{tpu_custom_call.1} parent=5 // pred_fallthru
      _
    %p200 = scmp.le.s32.totalorder 1, %s11
    %p201 = scmp.lt.s32.totalorder %s11, 3
    %p202 = pnand %p200, %p201
    %p203 = pneg %p202
    // Predicated region
    $region37: #{tpu_custom_call.1} parent=5 // pred_check
      _
    $region38: #{tpu_custom_call.1} parent=5 // pred_check_branch
      %205 = sbr.rel (%p202) target = $region40
    $region39: #{tpu_custom_call.1} parent=5 // pred_region
      %s206 = ssub.s32 %s11, 1
      %p207 = scmp.lt.s32.totalorder %s20, 1
      %s208 = scalar_select %p207, %s20, 1
      %s209 = smul.addr %s208, 54
      %s210 = smul.addr %s209, 4
      %s211 = scalar_lea.vmem %s0, %s210
      %p212 = pneg %p49
      %p213 = pneg %p46
      %p214 = pneg %p70
      %p215 = pneg %p67
      %p216 = pneg %p91
      %p217 = pneg %p88
      %p218 = pneg %p112
      %p219 = pneg %p109
      %p220 = pneg %p133
      %p221 = pneg %p130
      %p222 = pneg %p161
      %p223 = pneg %p158
      %s224 = smul.u32 32, %s21
      %p225 = scmp.lt.s32.totalorder %s20, 1
      %s226 = scalar_select %p225, %s20, 1
      %p227 = scmp.lt.s32.totalorder %s224, 31
      %s228 = scalar_select %p227, %s224, 31
      %s229 = smul.addr %s226, 96
      %s230 = sadd.s32 %s228, %s229
      %s231 = smul.addr %s230, 8
      %s232 = scalar_lea.vmem %s5, %s231
      %p233 = scmp.lt.s32.totalorder %s20, 1
      %s234 = scalar_select %p233, %s20, 1
      %s235 = smul.addr %s234, 54
      %s236 = smul.addr %s235, 4
      %s237 = scalar_lea.vmem %s0, %s236
      %s238 = smul.u32 32, %s21
      %p239 = scmp.lt.s32.totalorder %s20, 1
      %s240 = scalar_select %p239, %s20, 1
      %p241 = scmp.lt.s32.totalorder %s238, 31
      %s242 = scalar_select %p241, %s238, 31
      %s243 = smul.addr %s240, 96
      %s244 = sadd.s32 %s242, %s243
      %s245 = smul.addr %s244, 8
      %s246 = scalar_lea.vmem %s5, %s245
      %s247 = smul.u32 32, %s21
      %s249 = smul.u32 %s21, 16
      %s250 = smul.u32 %s249, 3
      %s251 = smul.addr %s250, 4
      %s252 = scalar_lea.vmem %s237, %s251
      %v253 = vld [vmem:[%s252] sm:$0xf]
      %v254 = vld [vmem:[%s252 + $0x4] sm:$0xf]
      %v255 = vld [vmem:[%s252 + $0x8] sm:$0x1]
      %v256 = vld [vmem:[%s252 + $0xc] sm:$0xf]
      %v257 = vld [vmem:[%s252 + $0x10] sm:$0xf]
      %v258 = vld [vmem:[%s252 + $0x14] sm:$0x1]
      %v259 = vld [vmem:[%s252 + $0x18] sm:$0xf]
      %v260 = vld [vmem:[%s252 + $0x1c] sm:$0xf]
      %v261 = vld [vmem:[%s252 + $0x20] sm:$0x1]
      %v262 = vld [vmem:[%s252 + $0x24] sm:$0xf]
      %v263 = vld [vmem:[%s252 + $0x28] sm:$0xf]
      %v264 = vld [vmem:[%s252 + $0x2c] sm:$0x1]
      %v265 = vld [vmem:[%s252 + $0x30] sm:$0xf]
      %v266 = vld [vmem:[%s252 + $0x34] sm:$0xf]
      %v267 = vld [vmem:[%s252 + $0x38] sm:$0x1]
      %v268 = vld [vmem:[%s252 + $0x3c] sm:$0xf]
      %v269 = vld [vmem:[%s252 + $0x40] sm:$0xf]
      %v270 = vld [vmem:[%s252 + $0x44] sm:$0x1]
      %v271 = vld [vmem:[%s252 + $0x48] sm:$0xf]
      %v272 = vld [vmem:[%s252 + $0x4c] sm:$0xf]
      %v273 = vld [vmem:[%s252 + $0x50] sm:$0x1]
      %v274 = vld [vmem:[%s252 + $0x54] sm:$0xf]
      %v275 = vld [vmem:[%s252 + $0x58] sm:$0xf]
      %v276 = vld [vmem:[%s252 + $0x5c] sm:$0x1]
      %v277 = vld [vmem:[%s252 + $0x60] sm:$0xf]
      %v278 = vld [vmem:[%s252 + $0x64] sm:$0xf]
      %v279 = vld [vmem:[%s252 + $0x68] sm:$0x1]
      %v280 = vld [vmem:[%s252 + $0x6c] sm:$0xf]
      %v281 = vld [vmem:[%s252 + $0x70] sm:$0xf]
      %v282 = vld [vmem:[%s252 + $0x74] sm:$0x1]
      %v283 = vld [vmem:[%s252 + $0x78] sm:$0xf]
      %v284 = vld [vmem:[%s252 + $0x7c] sm:$0xf]
      %v285 = vld [vmem:[%s252 + $0x80] sm:$0x1]
      %v286 = vld [vmem:[%s252 + $0x84] sm:$0xf]
      %v287 = vld [vmem:[%s252 + $0x88] sm:$0xf]
      %v288 = vld [vmem:[%s252 + $0x8c] sm:$0x1]
      %v289 = vld [vmem:[%s252 + $0x90] sm:$0xf]
      %v290 = vld [vmem:[%s252 + $0x94] sm:$0xf]
      %v291 = vld [vmem:[%s252 + $0x98] sm:$0x1]
      %v292 = vld [vmem:[%s252 + $0x9c] sm:$0xf]
      %v293 = vld [vmem:[%s252 + $0xa0] sm:$0xf]
      %v294 = vld [vmem:[%s252 + $0xa4] sm:$0x1]
      %v295 = vld [vmem:[%s252 + $0xa8] sm:$0xf]
      %v296 = vld [vmem:[%s252 + $0xac] sm:$0xf]
      %v297 = vld [vmem:[%s252 + $0xb0] sm:$0x1]
      %v298 = vld [vmem:[%s252 + $0xb4] sm:$0xf]
      %v299 = vld [vmem:[%s252 + $0xb8] sm:$0xf]
      %v300 = vld [vmem:[%s252 + $0xbc] sm:$0x1]
      %v301 = vld [vmem:[%s252 + $0xc0] sm:$0xf]
      %v302 = vld [vmem:[%s252 + $0xc4] sm:$0xf]
      %v303 = vld [vmem:[%s252 + $0xc8] sm:$0x1]
      %v304 = vld [vmem:[%s252 + $0xcc] sm:$0xf]
      %v305 = vld [vmem:[%s252 + $0xd0] sm:$0xf]
      %v306 = vld [vmem:[%s252 + $0xd4] sm:$0x1]
      %v339 = vunpack.c.l.b16 %v253
      %v340 = vunpack.c.l.b16 %v254
      %v341 = vunpack.c.l.b16 %v256
      %v342 = vunpack.c.l.b16 %v257
      %v343 = vunpack.c.l.b16 %v259
      %v344 = vunpack.c.l.b16 %v260
      %v345 = vunpack.c.l.b16 %v262
      %v346 = vunpack.c.l.b16 %v263
      %v347 = vunpack.c.l.b16 %v265
      %v348 = vunpack.c.l.b16 %v266
      %v349 = vunpack.c.l.b16 %v268
      %v350 = vunpack.c.l.b16 %v269
      %v351 = vunpack.c.l.b16 %v271
      %v352 = vunpack.c.l.b16 %v272
      %v353 = vunpack.c.l.b16 %v274
      %v354 = vunpack.c.l.b16 %v275
      %v355 = vunpack.c.l.b16 %v277
      %v356 = vunpack.c.l.b16 %v278
      %v357 = vunpack.c.l.b16 %v280
      %v358 = vunpack.c.l.b16 %v281
      %v359 = vunpack.c.l.b16 %v283
      %v360 = vunpack.c.l.b16 %v284
      %v361 = vunpack.c.l.b16 %v286
      %v362 = vunpack.c.l.b16 %v287
      %v363 = vunpack.c.l.b16 %v289
      %v364 = vunpack.c.l.b16 %v290
      %v365 = vunpack.c.l.b16 %v292
      %v366 = vunpack.c.l.b16 %v293
      %v367 = vunpack.c.l.b16 %v295
      %v368 = vunpack.c.l.b16 %v296
      %v369 = vunpack.c.l.b16 %v298
      %v370 = vunpack.c.l.b16 %v299
      %v371 = vpack.c.b16 %v340, %v339
      %v372 = vpack.c.b16 %v342, %v341
      %v373 = vpack.c.b16 %v344, %v343
      %v374 = vpack.c.b16 %v346, %v345
      %v375 = vpack.c.b16 %v348, %v347
      %v376 = vpack.c.b16 %v350, %v349
      %v377 = vpack.c.b16 %v352, %v351
      %v378 = vpack.c.b16 %v354, %v353
      %v379 = vpack.c.b16 %v356, %v355
      %v380 = vpack.c.b16 %v358, %v357
      %v381 = vpack.c.b16 %v360, %v359
      %v382 = vpack.c.b16 %v362, %v361
      %v383 = vpack.c.b16 %v364, %v363
      %v384 = vpack.c.b16 %v366, %v365
      %v385 = vpack.c.b16 %v368, %v367
      %v386 = vpack.c.b16 %v370, %v369
      %v403 = vunpack.c.l.b16 %v255
      %v404 = vunpack.c.l.b16 %v258
      %v405 = vunpack.c.l.b16 %v261
      %v406 = vunpack.c.l.b16 %v264
      %v407 = vunpack.c.l.b16 %v267
      %v408 = vunpack.c.l.b16 %v270
      %v409 = vunpack.c.l.b16 %v273
      %v410 = vunpack.c.l.b16 %v276
      %v411 = vunpack.c.l.b16 %v279
      %v412 = vunpack.c.l.b16 %v282
      %v413 = vunpack.c.l.b16 %v285
      %v414 = vunpack.c.l.b16 %v288
      %v415 = vunpack.c.l.b16 %v291
      %v416 = vunpack.c.l.b16 %v294
      %v417 = vunpack.c.l.b16 %v297
      %v418 = vunpack.c.l.b16 %v300
      %v419 = vpack.c.b16 %v403, %v403
      %v420 = vpack.c.b16 %v404, %v404
      %v421 = vpack.c.b16 %v405, %v405
      %v422 = vpack.c.b16 %v406, %v406
      %v423 = vpack.c.b16 %v407, %v407
      %v424 = vpack.c.b16 %v408, %v408
      %v425 = vpack.c.b16 %v409, %v409
      %v426 = vpack.c.b16 %v410, %v410
      %v427 = vpack.c.b16 %v411, %v411
      %v428 = vpack.c.b16 %v412, %v412
      %v429 = vpack.c.b16 %v413, %v413
      %v430 = vpack.c.b16 %v414, %v414
      %v431 = vpack.c.b16 %v415, %v415
      %v432 = vpack.c.b16 %v416, %v416
      %v433 = vpack.c.b16 %v417, %v417
      %v434 = vpack.c.b16 %v418, %v418
      %vm435 = vsmask.f32 7424
      %v437 = vshrl.u32 %v371, 16
      %v439 = vshll.u32 %v371, 16
      %v441 = vrot.slane %v439, 1
      %v442 = vor.u32 %v437, %v441
      %v444 = vshll.u32 %v419, 16
      %v446 = vrot.slane %v444, 1
      %v447 = vsel %vm435, %v442, %v446
      %v449 = vshrl.u32 %v372, 16
      %v451 = vshll.u32 %v372, 16
      %v453 = vrot.slane %v451, 1
      %v454 = vor.u32 %v449, %v453
      %v456 = vshll.u32 %v420, 16
      %v458 = vrot.slane %v456, 1
      %v459 = vsel %vm435, %v454, %v458
      %v461 = vshrl.u32 %v373, 16
      %v463 = vshll.u32 %v373, 16
      %v465 = vrot.slane %v463, 1
      %v466 = vor.u32 %v461, %v465
      %v468 = vshll.u32 %v421, 16
      %v470 = vrot.slane %v468, 1
      %v471 = vsel %vm435, %v466, %v470
      %v473 = vshrl.u32 %v374, 16
      %v475 = vshll.u32 %v374, 16
      %v477 = vrot.slane %v475, 1
      %v478 = vor.u32 %v473, %v477
      %v480 = vshll.u32 %v422, 16
      %v482 = vrot.slane %v480, 1
      %v483 = vsel %vm435, %v478, %v482
      %v485 = vshrl.u32 %v375, 16
      %v487 = vshll.u32 %v375, 16
      %v489 = vrot.slane %v487, 1
      %v490 = vor.u32 %v485, %v489
      %v492 = vshll.u32 %v423, 16
      %v494 = vrot.slane %v492, 1
      %v495 = vsel %vm435, %v490, %v494
      %v497 = vshrl.u32 %v376, 16
      %v499 = vshll.u32 %v376, 16
      %v501 = vrot.slane %v499, 1
      %v502 = vor.u32 %v497, %v501
      %v504 = vshll.u32 %v424, 16
      %v506 = vrot.slane %v504, 1
      %v507 = vsel %vm435, %v502, %v506
      %v509 = vshrl.u32 %v377, 16
      %v511 = vshll.u32 %v377, 16
      %v513 = vrot.slane %v511, 1
      %v514 = vor.u32 %v509, %v513
      %v516 = vshll.u32 %v425, 16
      %v518 = vrot.slane %v516, 1
      %v519 = vsel %vm435, %v514, %v518
      %v521 = vshrl.u32 %v378, 16
      %v523 = vshll.u32 %v378, 16
      %v525 = vrot.slane %v523, 1
      %v526 = vor.u32 %v521, %v525
      %v528 = vshll.u32 %v426, 16
      %v530 = vrot.slane %v528, 1
      %v531 = vsel %vm435, %v526, %v530
      %v533 = vshrl.u32 %v379, 16
      %v535 = vshll.u32 %v379, 16
      %v537 = vrot.slane %v535, 1
      %v538 = vor.u32 %v533, %v537
      %v540 = vshll.u32 %v427, 16
      %v542 = vrot.slane %v540, 1
      %v543 = vsel %vm435, %v538, %v542
      %v545 = vshrl.u32 %v380, 16
      %v547 = vshll.u32 %v380, 16
      %v549 = vrot.slane %v547, 1
      %v550 = vor.u32 %v545, %v549
      %v552 = vshll.u32 %v428, 16
      %v554 = vrot.slane %v552, 1
      %v555 = vsel %vm435, %v550, %v554
      %v557 = vshrl.u32 %v381, 16
      %v559 = vshll.u32 %v381, 16
      %v561 = vrot.slane %v559, 1
      %v562 = vor.u32 %v557, %v561
      %v564 = vshll.u32 %v429, 16
      %v566 = vrot.slane %v564, 1
      %v567 = vsel %vm435, %v562, %v566
      %v569 = vshrl.u32 %v382, 16
      %v571 = vshll.u32 %v382, 16
      %v573 = vrot.slane %v571, 1
      %v574 = vor.u32 %v569, %v573
      %v576 = vshll.u32 %v430, 16
      %v578 = vrot.slane %v576, 1
      %v579 = vsel %vm435, %v574, %v578
      %v581 = vshrl.u32 %v383, 16
      %v583 = vshll.u32 %v383, 16
      %v585 = vrot.slane %v583, 1
      %v586 = vor.u32 %v581, %v585
      %v588 = vshll.u32 %v431, 16
      %v590 = vrot.slane %v588, 1
      %v591 = vsel %vm435, %v586, %v590
      %v593 = vshrl.u32 %v384, 16
      %v595 = vshll.u32 %v384, 16
      %v597 = vrot.slane %v595, 1
      %v598 = vor.u32 %v593, %v597
      %v600 = vshll.u32 %v432, 16
      %v602 = vrot.slane %v600, 1
      %v603 = vsel %vm435, %v598, %v602
      %v605 = vshrl.u32 %v385, 16
      %v607 = vshll.u32 %v385, 16
      %v609 = vrot.slane %v607, 1
      %v610 = vor.u32 %v605, %v609
      %v612 = vshll.u32 %v433, 16
      %v614 = vrot.slane %v612, 1
      %v615 = vsel %vm435, %v610, %v614
      %v617 = vshrl.u32 %v386, 16
      %v619 = vshll.u32 %v386, 16
      %v621 = vrot.slane %v619, 1
      %v622 = vor.u32 %v617, %v621
      %v624 = vshll.u32 %v434, 16
      %v626 = vrot.slane %v624, 1
      %v627 = vsel %vm435, %v622, %v626
      %628 = vrot.lane.b32.xlu0 %v447, 4
      %v629 = vpop.permute.xlu0 %628
      %630 = vrot.lane.b32.xlu0 %v459, 4
      %v631 = vpop.permute.xlu0 %630
      %632 = vrot.lane.b32.xlu0 %v471, 4
      %v633 = vpop.permute.xlu0 %632
      %634 = vrot.lane.b32.xlu0 %v483, 4
      %v635 = vpop.permute.xlu0 %634
      %636 = vrot.lane.b32.xlu0 %v495, 4
      %v637 = vpop.permute.xlu0 %636
      %638 = vrot.lane.b32.xlu0 %v507, 4
      %v639 = vpop.permute.xlu0 %638
      %640 = vrot.lane.b32.xlu0 %v519, 4
      %v641 = vpop.permute.xlu0 %640
      %642 = vrot.lane.b32.xlu0 %v531, 4
      %v643 = vpop.permute.xlu0 %642
      %644 = vrot.lane.b32.xlu0 %v543, 4
      %v645 = vpop.permute.xlu0 %644
      %646 = vrot.lane.b32.xlu0 %v555, 4
      %v647 = vpop.permute.xlu0 %646
      %648 = vrot.lane.b32.xlu0 %v567, 4
      %v649 = vpop.permute.xlu0 %648
      %650 = vrot.lane.b32.xlu0 %v579, 4
      %v651 = vpop.permute.xlu0 %650
      %652 = vrot.lane.b32.xlu0 %v591, 4
      %v653 = vpop.permute.xlu0 %652
      %654 = vrot.lane.b32.xlu0 %v603, 4
      %v655 = vpop.permute.xlu0 %654
      %656 = vrot.lane.b32.xlu0 %v615, 4
      %v657 = vpop.permute.xlu0 %656
      %658 = vrot.lane.b32.xlu0 %v627, 4
      %v659 = vpop.permute.xlu0 %658
      %vm660 = vcmask 1046528
      %v661 = vrot.slane %v371, 1
      %v662 = vrot.slane %v419, 1
      %v663 = vsel %vm660, %v661, %v662
      %v664 = vrot.slane %v372, 1
      %v665 = vrot.slane %v420, 1
      %v666 = vsel %vm660, %v664, %v665
      %v667 = vrot.slane %v373, 1
      %v668 = vrot.slane %v421, 1
      %v669 = vsel %vm660, %v667, %v668
      %v670 = vrot.slane %v374, 1
      %v671 = vrot.slane %v422, 1
      %v672 = vsel %vm660, %v670, %v671
      %v673 = vrot.slane %v375, 1
      %v674 = vrot.slane %v423, 1
      %v675 = vsel %vm660, %v673, %v674
      %v676 = vrot.slane %v376, 1
      %v677 = vrot.slane %v424, 1
      %v678 = vsel %vm660, %v676, %v677
      %v679 = vrot.slane %v377, 1
      %v680 = vrot.slane %v425, 1
      %v681 = vsel %vm660, %v679, %v680
      %v682 = vrot.slane %v378, 1
      %v683 = vrot.slane %v426, 1
      %v684 = vsel %vm660, %v682, %v683
      %v685 = vrot.slane %v379, 1
      %v686 = vrot.slane %v427, 1
      %v687 = vsel %vm660, %v685, %v686
      %v688 = vrot.slane %v380, 1
      %v689 = vrot.slane %v428, 1
      %v690 = vsel %vm660, %v688, %v689
      %v691 = vrot.slane %v381, 1
      %v692 = vrot.slane %v429, 1
      %v693 = vsel %vm660, %v691, %v692
      %v694 = vrot.slane %v382, 1
      %v695 = vrot.slane %v430, 1
      %v696 = vsel %vm660, %v694, %v695
      %v697 = vrot.slane %v383, 1
      %v698 = vrot.slane %v431, 1
      %v699 = vsel %vm660, %v697, %v698
      %v700 = vrot.slane %v384, 1
      %v701 = vrot.slane %v432, 1
      %v702 = vsel %vm660, %v700, %v701
      %v703 = vrot.slane %v385, 1
      %v704 = vrot.slane %v433, 1
      %v705 = vsel %vm660, %v703, %v704
      %v706 = vrot.slane %v386, 1
      %v707 = vrot.slane %v434, 1
      %v708 = vsel %vm660, %v706, %v707
      %709 = vrot.lane.b32.xlu0 %v663, 8
      %v710 = vpop.permute.xlu0 %709
      %711 = vrot.lane.b32.xlu0 %v666, 8
      %v712 = vpop.permute.xlu0 %711
      %713 = vrot.lane.b32.xlu0 %v669, 8
      %v714 = vpop.permute.xlu0 %713
      %715 = vrot.lane.b32.xlu0 %v672, 8
      %v716 = vpop.permute.xlu0 %715
      %717 = vrot.lane.b32.xlu0 %v675, 8
      %v718 = vpop.permute.xlu0 %717
      %719 = vrot.lane.b32.xlu0 %v678, 8
      %v720 = vpop.permute.xlu0 %719
      %721 = vrot.lane.b32.xlu0 %v681, 8
      %v722 = vpop.permute.xlu0 %721
      %723 = vrot.lane.b32.xlu0 %v684, 8
      %v724 = vpop.permute.xlu0 %723
      %725 = vrot.lane.b32.xlu0 %v687, 8
      %v726 = vpop.permute.xlu0 %725
      %727 = vrot.lane.b32.xlu0 %v690, 8
      %v728 = vpop.permute.xlu0 %727
      %729 = vrot.lane.b32.xlu0 %v693, 8
      %v730 = vpop.permute.xlu0 %729
      %731 = vrot.lane.b32.xlu0 %v696, 8
      %v732 = vpop.permute.xlu0 %731
      %733 = vrot.lane.b32.xlu0 %v699, 8
      %v734 = vpop.permute.xlu0 %733
      %735 = vrot.lane.b32.xlu0 %v702, 8
      %v736 = vpop.permute.xlu0 %735
      %737 = vrot.lane.b32.xlu0 %v705, 8
      %v738 = vpop.permute.xlu0 %737
      %739 = vrot.lane.b32.xlu0 %v708, 8
      %v740 = vpop.permute.xlu0 %739
      %v743 = vunpack.c.l.b16 %v301
      %v744 = vunpack.c.l.b16 %v302
      %v745 = vpack.c.b16 %v744, %v743
      %746 = vrot.lane.b32.xlu0 %v372, 12
      %v747 = vpop.permute.xlu0 %746
      %748 = vrot.lane.b32.xlu0 %v373, 12
      %v749 = vpop.permute.xlu0 %748
      %750 = vrot.lane.b32.xlu0 %v374, 12
      %v751 = vpop.permute.xlu0 %750
      %752 = vrot.lane.b32.xlu0 %v375, 12
      %v753 = vpop.permute.xlu0 %752
      %754 = vrot.lane.b32.xlu0 %v376, 12
      %v755 = vpop.permute.xlu0 %754
      %756 = vrot.lane.b32.xlu0 %v377, 12
      %v757 = vpop.permute.xlu0 %756
      %758 = vrot.lane.b32.xlu0 %v378, 12
      %v759 = vpop.permute.xlu0 %758
      %760 = vrot.lane.b32.xlu0 %v379, 12
      %v761 = vpop.permute.xlu0 %760
      %762 = vrot.lane.b32.xlu0 %v380, 12
      %v763 = vpop.permute.xlu0 %762
      %764 = vrot.lane.b32.xlu0 %v381, 12
      %v765 = vpop.permute.xlu0 %764
      %766 = vrot.lane.b32.xlu0 %v382, 12
      %v767 = vpop.permute.xlu0 %766
      %768 = vrot.lane.b32.xlu0 %v383, 12
      %v769 = vpop.permute.xlu0 %768
      %770 = vrot.lane.b32.xlu0 %v384, 12
      %v771 = vpop.permute.xlu0 %770
      %772 = vrot.lane.b32.xlu0 %v385, 12
      %v773 = vpop.permute.xlu0 %772
      %774 = vrot.lane.b32.xlu0 %v386, 12
      %v775 = vpop.permute.xlu0 %774
      %776 = vrot.lane.b32.xlu0 %v745, 12
      %v777 = vpop.permute.xlu0 %776
      %v779 = vunpack.c.l.b16 %v303
      %v780 = vpack.c.b16 %v779, %v779
      %v782 = vshrl.u32 %v745, 16
      %v784 = vshll.u32 %v745, 16
      %v786 = vrot.slane %v784, 1
      %v787 = vor.u32 %v782, %v786
      %v789 = vshll.u32 %v780, 16
      %v791 = vrot.slane %v789, 1
      %v792 = vsel %vm435, %v787, %v791
      %793 = vrot.lane.b32.xlu0 %v459, 16
      %v794 = vpop.permute.xlu0 %793
      %795 = vrot.lane.b32.xlu0 %v471, 16
      %v796 = vpop.permute.xlu0 %795
      %797 = vrot.lane.b32.xlu0 %v483, 16
      %v798 = vpop.permute.xlu0 %797
      %799 = vrot.lane.b32.xlu0 %v495, 16
      %v800 = vpop.permute.xlu0 %799
      %801 = vrot.lane.b32.xlu0 %v507, 16
      %v802 = vpop.permute.xlu0 %801
      %803 = vrot.lane.b32.xlu0 %v519, 16
      %v804 = vpop.permute.xlu0 %803
      %805 = vrot.lane.b32.xlu0 %v531, 16
      %v806 = vpop.permute.xlu0 %805
      %807 = vrot.lane.b32.xlu0 %v543, 16
      %v808 = vpop.permute.xlu0 %807
      %809 = vrot.lane.b32.xlu0 %v555, 16
      %v810 = vpop.permute.xlu0 %809
      %811 = vrot.lane.b32.xlu0 %v567, 16
      %v812 = vpop.permute.xlu0 %811
      %813 = vrot.lane.b32.xlu0 %v579, 16
      %v814 = vpop.permute.xlu0 %813
      %815 = vrot.lane.b32.xlu0 %v591, 16
      %v816 = vpop.permute.xlu0 %815
      %817 = vrot.lane.b32.xlu0 %v603, 16
      %v818 = vpop.permute.xlu0 %817
      %819 = vrot.lane.b32.xlu0 %v615, 16
      %v820 = vpop.permute.xlu0 %819
      %821 = vrot.lane.b32.xlu0 %v627, 16
      %v822 = vpop.permute.xlu0 %821
      %823 = vrot.lane.b32.xlu0 %v792, 16
      %v824 = vpop.permute.xlu0 %823
      %v825 = vrot.slane %v745, 1
      %v826 = vrot.slane %v780, 1
      %v827 = vsel %vm660, %v825, %v826
      %828 = vrot.lane.b32.xlu0 %v666, 20
      %v829 = vpop.permute.xlu0 %828
      %830 = vrot.lane.b32.xlu0 %v669, 20
      %v831 = vpop.permute.xlu0 %830
      %832 = vrot.lane.b32.xlu0 %v672, 20
      %v833 = vpop.permute.xlu0 %832
      %834 = vrot.lane.b32.xlu0 %v675, 20
      %v835 = vpop.permute.xlu0 %834
      %836 = vrot.lane.b32.xlu0 %v678, 20
      %v837 = vpop.permute.xlu0 %836
      %838 = vrot.lane.b32.xlu0 %v681, 20
      %v839 = vpop.permute.xlu0 %838
      %840 = vrot.lane.b32.xlu0 %v684, 20
      %v841 = vpop.permute.xlu0 %840
      %842 = vrot.lane.b32.xlu0 %v687, 20
      %v843 = vpop.permute.xlu0 %842
      %844 = vrot.lane.b32.xlu0 %v690, 20
      %v845 = vpop.permute.xlu0 %844
      %846 = vrot.lane.b32.xlu0 %v693, 20
      %v847 = vpop.permute.xlu0 %846
      %848 = vrot.lane.b32.xlu0 %v696, 20
      %v849 = vpop.permute.xlu0 %848
      %850 = vrot.lane.b32.xlu0 %v699, 20
      %v851 = vpop.permute.xlu0 %850
      %852 = vrot.lane.b32.xlu0 %v702, 20
      %v853 = vpop.permute.xlu0 %852
      %854 = vrot.lane.b32.xlu0 %v705, 20
      %v855 = vpop.permute.xlu0 %854
      %856 = vrot.lane.b32.xlu0 %v708, 20
      %v857 = vpop.permute.xlu0 %856
      %858 = vrot.lane.b32.xlu0 %v827, 20
      %v859 = vpop.permute.xlu0 %858
      %v862 = vunpack.c.l.b16 %v304
      %v863 = vunpack.c.l.b16 %v305
      %v864 = vpack.c.b16 %v863, %v862
      %865 = vrot.lane.b32.xlu0 %v373, 24
      %v866 = vpop.permute.xlu0 %865
      %867 = vrot.lane.b32.xlu0 %v374, 24
      %v868 = vpop.permute.xlu0 %867
      %869 = vrot.lane.b32.xlu0 %v375, 24
      %v870 = vpop.permute.xlu0 %869
      %871 = vrot.lane.b32.xlu0 %v376, 24
      %v872 = vpop.permute.xlu0 %871
      %873 = vrot.lane.b32.xlu0 %v377, 24
      %v874 = vpop.permute.xlu0 %873
      %875 = vrot.lane.b32.xlu0 %v378, 24
      %v876 = vpop.permute.xlu0 %875
      %877 = vrot.lane.b32.xlu0 %v379, 24
      %v878 = vpop.permute.xlu0 %877
      %879 = vrot.lane.b32.xlu0 %v380, 24
      %v880 = vpop.permute.xlu0 %879
      %881 = vrot.lane.b32.xlu0 %v381, 24
      %v882 = vpop.permute.xlu0 %881
      %883 = vrot.lane.b32.xlu0 %v382, 24
      %v884 = vpop.permute.xlu0 %883
      %885 = vrot.lane.b32.xlu0 %v383, 24
      %v886 = vpop.permute.xlu0 %885
      %887 = vrot.lane.b32.xlu0 %v384, 24
      %v888 = vpop.permute.xlu0 %887
      %889 = vrot.lane.b32.xlu0 %v385, 24
      %v890 = vpop.permute.xlu0 %889
      %891 = vrot.lane.b32.xlu0 %v386, 24
      %v892 = vpop.permute.xlu0 %891
      %893 = vrot.lane.b32.xlu0 %v745, 24
      %v894 = vpop.permute.xlu0 %893
      %895 = vrot.lane.b32.xlu0 %v864, 24
      %v896 = vpop.permute.xlu0 %895
      %v898 = vunpack.c.l.b16 %v306
      %v899 = vpack.c.b16 %v898, %v898
      %v901 = vshrl.u32 %v864, 16
      %v903 = vshll.u32 %v864, 16
      %v905 = vrot.slane %v903, 1
      %v906 = vor.u32 %v901, %v905
      %v908 = vshll.u32 %v899, 16
      %v910 = vrot.slane %v908, 1
      %v911 = vsel %vm435, %v906, %v910
      %912 = vrot.lane.b32.xlu0 %v471, 28
      %v913 = vpop.permute.xlu0 %912
      %914 = vrot.lane.b32.xlu0 %v483, 28
      %v915 = vpop.permute.xlu0 %914
      %916 = vrot.lane.b32.xlu0 %v495, 28
      %v917 = vpop.permute.xlu0 %916
      %918 = vrot.lane.b32.xlu0 %v507, 28
      %v919 = vpop.permute.xlu0 %918
      %920 = vrot.lane.b32.xlu0 %v519, 28
      %v921 = vpop.permute.xlu0 %920
      %922 = vrot.lane.b32.xlu0 %v531, 28
      %v923 = vpop.permute.xlu0 %922
      %924 = vrot.lane.b32.xlu0 %v543, 28
      %v925 = vpop.permute.xlu0 %924
      %926 = vrot.lane.b32.xlu0 %v555, 28
      %v927 = vpop.permute.xlu0 %926
      %928 = vrot.lane.b32.xlu0 %v567, 28
      %v929 = vpop.permute.xlu0 %928
      %930 = vrot.lane.b32.xlu0 %v579, 28
      %v931 = vpop.permute.xlu0 %930
      %932 = vrot.lane.b32.xlu0 %v591, 28
      %v933 = vpop.permute.xlu0 %932
      %934 = vrot.lane.b32.xlu0 %v603, 28
      %v935 = vpop.permute.xlu0 %934
      %936 = vrot.lane.b32.xlu0 %v615, 28
      %v937 = vpop.permute.xlu0 %936
      %938 = vrot.lane.b32.xlu0 %v627, 28
      %v939 = vpop.permute.xlu0 %938
      %940 = vrot.lane.b32.xlu0 %v792, 28
      %v941 = vpop.permute.xlu0 %940
      %942 = vrot.lane.b32.xlu0 %v911, 28
      %v943 = vpop.permute.xlu0 %942
      %v944 = vrot.slane %v864, 1
      %v945 = vrot.slane %v899, 1
      %v946 = vsel %vm660, %v944, %v945
      %947 = vrot.lane.b32.xlu0 %v669, 32
      %v948 = vpop.permute.xlu0 %947
      %949 = vrot.lane.b32.xlu0 %v672, 32
      %v950 = vpop.permute.xlu0 %949
      %951 = vrot.lane.b32.xlu0 %v675, 32
      %v952 = vpop.permute.xlu0 %951
      %953 = vrot.lane.b32.xlu0 %v678, 32
      %v954 = vpop.permute.xlu0 %953
      %955 = vrot.lane.b32.xlu0 %v681, 32
      %v956 = vpop.permute.xlu0 %955
      %957 = vrot.lane.b32.xlu0 %v684, 32
      %v958 = vpop.permute.xlu0 %957
      %959 = vrot.lane.b32.xlu0 %v687, 32
      %v960 = vpop.permute.xlu0 %959
      %961 = vrot.lane.b32.xlu0 %v690, 32
      %v962 = vpop.permute.xlu0 %961
      %963 = vrot.lane.b32.xlu0 %v693, 32
      %v964 = vpop.permute.xlu0 %963
      %965 = vrot.lane.b32.xlu0 %v696, 32
      %v966 = vpop.permute.xlu0 %965
      %967 = vrot.lane.b32.xlu0 %v699, 32
      %v968 = vpop.permute.xlu0 %967
      %969 = vrot.lane.b32.xlu0 %v702, 32
      %v970 = vpop.permute.xlu0 %969
      %971 = vrot.lane.b32.xlu0 %v705, 32
      %v972 = vpop.permute.xlu0 %971
      %973 = vrot.lane.b32.xlu0 %v708, 32
      %v974 = vpop.permute.xlu0 %973
      %975 = vrot.lane.b32.xlu0 %v827, 32
      %v976 = vpop.permute.xlu0 %975
      %977 = vrot.lane.b32.xlu0 %v946, 32
      %v978 = vpop.permute.xlu0 %977
      %vm979 = vcmask 31744
      %v981 = vsel %vm979, %v371, %v629
      %v983 = vsel %vm979, %v372, %v631
      %v985 = vsel %vm979, %v373, %v633
      %v987 = vsel %vm979, %v374, %v635
      %v989 = vsel %vm979, %v375, %v637
      %v991 = vsel %vm979, %v376, %v639
      %v993 = vsel %vm979, %v377, %v641
      %v995 = vsel %vm979, %v378, %v643
      %v997 = vsel %vm979, %v379, %v645
      %v999 = vsel %vm979, %v380, %v647
      %v1001 = vsel %vm979, %v381, %v649
      %v1003 = vsel %vm979, %v382, %v651
      %v1005 = vsel %vm979, %v383, %v653
      %v1007 = vsel %vm979, %v384, %v655
      %v1009 = vsel %vm979, %v385, %v657
      %v1011 = vsel %vm979, %v386, %v659
      %vm1012 = vcmask 64512
      %v1014 = vsel %vm1012, %v981, %v710
      %v1016 = vsel %vm1012, %v983, %v712
      %v1018 = vsel %vm1012, %v985, %v714
      %v1020 = vsel %vm1012, %v987, %v716
      %v1022 = vsel %vm1012, %v989, %v718
      %v1024 = vsel %vm1012, %v991, %v720
      %v1026 = vsel %vm1012, %v993, %v722
      %v1028 = vsel %vm1012, %v995, %v724
      %v1030 = vsel %vm1012, %v997, %v726
      %v1032 = vsel %vm1012, %v999, %v728
      %v1034 = vsel %vm1012, %v1001, %v730
      %v1036 = vsel %vm1012, %v1003, %v732
      %v1038 = vsel %vm1012, %v1005, %v734
      %v1040 = vsel %vm1012, %v1007, %v736
      %v1042 = vsel %vm1012, %v1009, %v738
      %v1044 = vsel %vm1012, %v1011, %v740
      %vm1045 = vcmask 97280
      %v1047 = vsel %vm1045, %v1014, %v747
      %v1049 = vsel %vm1045, %v1016, %v749
      %v1051 = vsel %vm1045, %v1018, %v751
      %v1053 = vsel %vm1045, %v1020, %v753
      %v1055 = vsel %vm1045, %v1022, %v755
      %v1057 = vsel %vm1045, %v1024, %v757
      %v1059 = vsel %vm1045, %v1026, %v759
      %v1061 = vsel %vm1045, %v1028, %v761
      %v1063 = vsel %vm1045, %v1030, %v763
      %v1065 = vsel %vm1045, %v1032, %v765
      %v1067 = vsel %vm1045, %v1034, %v767
      %v1069 = vsel %vm1045, %v1036, %v769
      %v1071 = vsel %vm1045, %v1038, %v771
      %v1073 = vsel %vm1045, %v1040, %v773
      %v1075 = vsel %vm1045, %v1042, %v775
      %v1077 = vsel %vm1045, %v1044, %v777
      %vm1078 = vcmask 130048
      %v1080 = vsel %vm1078, %v1047, %v794
      %v1082 = vsel %vm1078, %v1049, %v796
      %v1084 = vsel %vm1078, %v1051, %v798
      %v1086 = vsel %vm1078, %v1053, %v800
      %v1088 = vsel %vm1078, %v1055, %v802
      %v1090 = vsel %vm1078, %v1057, %v804
      %v1092 = vsel %vm1078, %v1059, %v806
      %v1094 = vsel %vm1078, %v1061, %v808
      %v1096 = vsel %vm1078, %v1063, %v810
      %v1098 = vsel %vm1078, %v1065, %v812
      %v1100 = vsel %vm1078, %v1067, %v814
      %v1102 = vsel %vm1078, %v1069, %v816
      %v1104 = vsel %vm1078, %v1071, %v818
      %v1106 = vsel %vm1078, %v1073, %v820
      %v1108 = vsel %vm1078, %v1075, %v822
      %v1110 = vsel %vm1078, %v1077, %v824
      %vm1111 = vcmask 162816
      %v1113 = vsel %vm1111, %v1080, %v829
      %v1115 = vsel %vm1111, %v1082, %v831
      %v1117 = vsel %vm1111, %v1084, %v833
      %v1119 = vsel %vm1111, %v1086, %v835
      %v1121 = vsel %vm1111, %v1088, %v837
      %v1123 = vsel %vm1111, %v1090, %v839
      %v1125 = vsel %vm1111, %v1092, %v841
      %v1127 = vsel %vm1111, %v1094, %v843
      %v1129 = vsel %vm1111, %v1096, %v845
      %v1131 = vsel %vm1111, %v1098, %v847
      %v1133 = vsel %vm1111, %v1100, %v849
      %v1135 = vsel %vm1111, %v1102, %v851
      %v1137 = vsel %vm1111, %v1104, %v853
      %v1139 = vsel %vm1111, %v1106, %v855
      %v1141 = vsel %vm1111, %v1108, %v857
      %v1143 = vsel %vm1111, %v1110, %v859
      %vm1144 = vcmask 195584
      %v1146 = vsel %vm1144, %v1113, %v866
      %v1148 = vsel %vm1144, %v1115, %v868
      %v1150 = vsel %vm1144, %v1117, %v870
      %v1152 = vsel %vm1144, %v1119, %v872
      %v1154 = vsel %vm1144, %v1121, %v874
      %v1156 = vsel %vm1144, %v1123, %v876
      %v1158 = vsel %vm1144, %v1125, %v878
      %v1160 = vsel %vm1144, %v1127, %v880
      %v1162 = vsel %vm1144, %v1129, %v882
      %v1164 = vsel %vm1144, %v1131, %v884
      %v1166 = vsel %vm1144, %v1133, %v886
      %v1168 = vsel %vm1144, %v1135, %v888
      %v1170 = vsel %vm1144, %v1137, %v890
      %v1172 = vsel %vm1144, %v1139, %v892
      %v1174 = vsel %vm1144, %v1141, %v894
      %v1176 = vsel %vm1144, %v1143, %v896
      %vm1177 = vcmask 228352
      %v1179 = vsel %vm1177, %v1146, %v913
      %v1181 = vsel %vm1177, %v1148, %v915
      %v1183 = vsel %vm1177, %v1150, %v917
      %v1185 = vsel %vm1177, %v1152, %v919
      %v1187 = vsel %vm1177, %v1154, %v921
      %v1189 = vsel %vm1177, %v1156, %v923
      %v1191 = vsel %vm1177, %v1158, %v925
      %v1193 = vsel %vm1177, %v1160, %v927
      %v1195 = vsel %vm1177, %v1162, %v929
      %v1197 = vsel %vm1177, %v1164, %v931
      %v1199 = vsel %vm1177, %v1166, %v933
      %v1201 = vsel %vm1177, %v1168, %v935
      %v1203 = vsel %vm1177, %v1170, %v937
      %v1205 = vsel %vm1177, %v1172, %v939
      %v1207 = vsel %vm1177, %v1174, %v941
      %v1209 = vsel %vm1177, %v1176, %v943
      %vm1210 = vcmask 261120
      %v1212 = vsel %vm1210, %v1179, %v948
      %v1214 = vsel %vm1210, %v1181, %v950
      %v1216 = vsel %vm1210, %v1183, %v952
      %v1218 = vsel %vm1210, %v1185, %v954
      %v1220 = vsel %vm1210, %v1187, %v956
      %v1222 = vsel %vm1210, %v1189, %v958
      %v1224 = vsel %vm1210, %v1191, %v960
      %v1226 = vsel %vm1210, %v1193, %v962
      %v1228 = vsel %vm1210, %v1195, %v964
      %v1230 = vsel %vm1210, %v1197, %v966
      %v1232 = vsel %vm1210, %v1199, %v968
      %v1234 = vsel %vm1210, %v1201, %v970
      %v1236 = vsel %vm1210, %v1203, %v972
      %v1238 = vsel %vm1210, %v1205, %v974
      %v1240 = vsel %vm1210, %v1207, %v976
      %v1242 = vsel %vm1210, %v1209, %v978
      %v1243 = vld [vmem:[%s1] sm:$0xf]
      %v1244 = vld [vmem:[%s1 + $0x4] sm:$0xf]
      %v1245 = vld [vmem:[%s1 + $0x8] sm:$0xf]
      %v1246 = vld [vmem:[%s1 + $0xc] sm:$0xf]
      %v1247 = vld [vmem:[%s1 + $0x10] sm:$0x3]
      %v1248 = vld [vmem:[%s2] sm:$0x1]
      %v1250 = vperm.slane %v1248, 0
      %v1257 = vunpack.c.l.b16 %v1243
      %v1258 = vunpack.c.l.b16 %v1244
      %v1259 = vunpack.c.l.b16 %v1245
      %v1260 = vunpack.c.l.b16 %v1246
      %v1261 = vunpack.c.l.b16 %v1247
      %v1262 = vpack.c.b16 %v1258, %v1257
      %v1263 = vpack.c.b16 %v1260, %v1259
      %v1264 = vpack.c.b16 %v1261, %v1261
      %vm1267 = vcmask 293888
      %v1268 = vsel %vm1267, %v1212, 0
      %v1270 = vsel %vm1267, %v1214, 0
      %v1272 = vsel %vm1267, %v1216, 0
      %v1274 = vsel %vm1267, %v1218, 0
      %v1276 = vsel %vm1267, %v1220, 0
      %v1278 = vsel %vm1267, %v1222, 0
      %v1280 = vsel %vm1267, %v1224, 0
      %v1282 = vsel %vm1267, %v1226, 0
      %v1284 = vsel %vm1267, %v1228, 0
      %v1286 = vsel %vm1267, %v1230, 0
      %v1288 = vsel %vm1267, %v1232, 0
      %v1290 = vsel %vm1267, %v1234, 0
      %v1292 = vsel %vm1267, %v1236, 0
      %v1294 = vsel %vm1267, %v1238, 0
      %v1296 = vsel %vm1267, %v1240, 0
      %v1298 = vsel %vm1267, %v1242, 0
      %vm1300 = vcmask 1041408
      %v1302 = vsel %vm1300, %v1264, 0
      %1304 = vmatpush.bf16.msra.mxu0 0
      %1305 = vmatpush.bf16.msra.mxu0 0
      %1306 = vmatpush.bf16.msra.mxu0 0
      %1307 = vmatpush.bf16.msra.mxu0 0
      %1308 = vmatpush.bf16.msra.mxu0 0
      %1309 = vmatpush.bf16.msra.mxu0 %v1302
      %1310 = vmatpush.bf16.msra.mxu0 %v1263
      %1311 = vmatpush.bf16.msra.mxu0 %v1262
      %1312 = vmatmul.bf16.gmra.mxu0 %v1268
      %v1313 = vpop.f32.mrf.mxu0
      %v1314 = vadd.f32 %v1250, %v1313
      %v1315 = vpop.f32.mrf.mxu0
      %v1316 = vadd.f32 %v1250, %v1315
      %1317 = vmatmul.bf16.gmra.mxu0 %v1270
      %v1318 = vpop.f32.mrf.mxu0
      %v1319 = vadd.f32 %v1250, %v1318
      %v1320 = vpop.f32.mrf.mxu0
      %v1321 = vadd.f32 %v1250, %v1320
      %1322 = vmatmul.bf16.gmra.mxu0 %v1272
      %v1323 = vpop.f32.mrf.mxu0
      %v1324 = vadd.f32 %v1250, %v1323
      %v1325 = vpop.f32.mrf.mxu0
      %v1326 = vadd.f32 %v1250, %v1325
      %1327 = vmatmul.bf16.gmra.mxu0 %v1274
      %v1328 = vpop.f32.mrf.mxu0
      %v1329 = vadd.f32 %v1250, %v1328
      %v1330 = vpop.f32.mrf.mxu0
      %v1331 = vadd.f32 %v1250, %v1330
      %1332 = vmatmul.bf16.gmra.mxu0 %v1276
      %v1333 = vpop.f32.mrf.mxu0
      %v1334 = vadd.f32 %v1250, %v1333
      %v1335 = vpop.f32.mrf.mxu0
      %v1336 = vadd.f32 %v1250, %v1335
      %1337 = vmatmul.bf16.gmra.mxu0 %v1278
      %v1338 = vpop.f32.mrf.mxu0
      %v1339 = vadd.f32 %v1250, %v1338
      %v1340 = vpop.f32.mrf.mxu0
      %v1341 = vadd.f32 %v1250, %v1340
      %1342 = vmatmul.bf16.gmra.mxu0 %v1280
      %v1343 = vpop.f32.mrf.mxu0
      %v1344 = vadd.f32 %v1250, %v1343
      %v1345 = vpop.f32.mrf.mxu0
      %v1346 = vadd.f32 %v1250, %v1345
      %1347 = vmatmul.bf16.gmra.mxu0 %v1282
      %v1348 = vpop.f32.mrf.mxu0
      %v1349 = vadd.f32 %v1250, %v1348
      %v1350 = vpop.f32.mrf.mxu0
      %v1351 = vadd.f32 %v1250, %v1350
      %1352 = vmatmul.bf16.gmra.mxu0 %v1284
      %v1353 = vpop.f32.mrf.mxu0
      %v1354 = vadd.f32 %v1250, %v1353
      %v1355 = vpop.f32.mrf.mxu0
      %v1356 = vadd.f32 %v1250, %v1355
      %1357 = vmatmul.bf16.gmra.mxu0 %v1286
      %v1358 = vpop.f32.mrf.mxu0
      %v1359 = vadd.f32 %v1250, %v1358
      %v1360 = vpop.f32.mrf.mxu0
      %v1361 = vadd.f32 %v1250, %v1360
      %1362 = vmatmul.bf16.gmra.mxu0 %v1288
      %v1363 = vpop.f32.mrf.mxu0
      %v1364 = vadd.f32 %v1250, %v1363
      %v1365 = vpop.f32.mrf.mxu0
      %v1366 = vadd.f32 %v1250, %v1365
      %1367 = vmatmul.bf16.gmra.mxu0 %v1290
      %v1368 = vpop.f32.mrf.mxu0
      %v1369 = vadd.f32 %v1250, %v1368
      %v1370 = vpop.f32.mrf.mxu0
      %v1371 = vadd.f32 %v1250, %v1370
      %1372 = vmatmul.bf16.gmra.mxu0 %v1292
      %v1373 = vpop.f32.mrf.mxu0
      %v1374 = vadd.f32 %v1250, %v1373
      %v1375 = vpop.f32.mrf.mxu0
      %v1376 = vadd.f32 %v1250, %v1375
      %1377 = vmatmul.bf16.gmra.mxu0 %v1294
      %v1378 = vpop.f32.mrf.mxu0
      %v1379 = vadd.f32 %v1250, %v1378
      %v1380 = vpop.f32.mrf.mxu0
      %v1381 = vadd.f32 %v1250, %v1380
      %1382 = vmatmul.bf16.gmra.mxu0 %v1296
      %v1383 = vpop.f32.mrf.mxu0
      %v1384 = vadd.f32 %v1250, %v1383
      %v1385 = vpop.f32.mrf.mxu0
      %v1386 = vadd.f32 %v1250, %v1385
      %1387 = vmatmul.bf16.gmra.mxu0 %v1298
      %v1388 = vpop.f32.mrf.mxu0
      %v1389 = vadd.f32 %v1250, %v1388
      %v1390 = vpop.f32.mrf.mxu0
      %v1391 = vadd.f32 %v1250, %v1390
      %1392 = vdwg.mxu0
      %v1393 = vmul.f32 %v1314, 0.1
      %v1394 = vmul.f32 %v1316, 0.1
      %v1395 = vmul.f32 %v1319, 0.1
      %v1396 = vmul.f32 %v1321, 0.1
      %v1397 = vmul.f32 %v1324, 0.1
      %v1398 = vmul.f32 %v1326, 0.1
      %v1399 = vmul.f32 %v1329, 0.1
      %v1400 = vmul.f32 %v1331, 0.1
      %v1401 = vmul.f32 %v1334, 0.1
      %v1402 = vmul.f32 %v1336, 0.1
      %v1403 = vmul.f32 %v1339, 0.1
      %v1404 = vmul.f32 %v1341, 0.1
      %v1405 = vmul.f32 %v1344, 0.1
      %v1406 = vmul.f32 %v1346, 0.1
      %v1407 = vmul.f32 %v1349, 0.1
      %v1408 = vmul.f32 %v1351, 0.1
      %v1409 = vmul.f32 %v1354, 0.1
      %v1410 = vmul.f32 %v1356, 0.1
      %v1411 = vmul.f32 %v1359, 0.1
      %v1412 = vmul.f32 %v1361, 0.1
      %v1413 = vmul.f32 %v1364, 0.1
      %v1414 = vmul.f32 %v1366, 0.1
      %v1415 = vmul.f32 %v1369, 0.1
      %v1416 = vmul.f32 %v1371, 0.1
      %v1417 = vmul.f32 %v1374, 0.1
      %v1418 = vmul.f32 %v1376, 0.1
      %v1419 = vmul.f32 %v1379, 0.1
      %v1420 = vmul.f32 %v1381, 0.1
      %v1421 = vmul.f32 %v1384, 0.1
      %v1422 = vmul.f32 %v1386, 0.1
      %v1423 = vmul.f32 %v1389, 0.1
      %v1424 = vmul.f32 %v1391, 0.1
      %v1425 = vmax.f32 %v1314, %v1393
      %v1426 = vmax.f32 %v1316, %v1394
      %v1427 = vmax.f32 %v1319, %v1395
      %v1428 = vmax.f32 %v1321, %v1396
      %v1429 = vmax.f32 %v1324, %v1397
      %v1430 = vmax.f32 %v1326, %v1398
      %v1431 = vmax.f32 %v1329, %v1399
      %v1432 = vmax.f32 %v1331, %v1400
      %v1433 = vmax.f32 %v1334, %v1401
      %v1434 = vmax.f32 %v1336, %v1402
      %v1435 = vmax.f32 %v1339, %v1403
      %v1436 = vmax.f32 %v1341, %v1404
      %v1437 = vmax.f32 %v1344, %v1405
      %v1438 = vmax.f32 %v1346, %v1406
      %v1439 = vmax.f32 %v1349, %v1407
      %v1440 = vmax.f32 %v1351, %v1408
      %v1441 = vmax.f32 %v1354, %v1409
      %v1442 = vmax.f32 %v1356, %v1410
      %v1443 = vmax.f32 %v1359, %v1411
      %v1444 = vmax.f32 %v1361, %v1412
      %v1445 = vmax.f32 %v1364, %v1413
      %v1446 = vmax.f32 %v1366, %v1414
      %v1447 = vmax.f32 %v1369, %v1415
      %v1448 = vmax.f32 %v1371, %v1416
      %v1449 = vmax.f32 %v1374, %v1417
      %v1450 = vmax.f32 %v1376, %v1418
      %v1451 = vmax.f32 %v1379, %v1419
      %v1452 = vmax.f32 %v1381, %v1420
      %v1453 = vmax.f32 %v1384, %v1421
      %v1454 = vmax.f32 %v1386, %v1422
      %v1455 = vmax.f32 %v1389, %v1423
      %v1456 = vmax.f32 %v1391, %v1424
      %v1457 = vpack.c.bf16 %v1426, %v1425
      %v1458 = vpack.c.bf16 %v1428, %v1427
      %v1459 = vpack.c.bf16 %v1430, %v1429
      %v1460 = vpack.c.bf16 %v1432, %v1431
      %v1461 = vpack.c.bf16 %v1434, %v1433
      %v1462 = vpack.c.bf16 %v1436, %v1435
      %v1463 = vpack.c.bf16 %v1438, %v1437
      %v1464 = vpack.c.bf16 %v1440, %v1439
      %v1465 = vpack.c.bf16 %v1442, %v1441
      %v1466 = vpack.c.bf16 %v1444, %v1443
      %v1467 = vpack.c.bf16 %v1446, %v1445
      %v1468 = vpack.c.bf16 %v1448, %v1447
      %v1469 = vpack.c.bf16 %v1450, %v1449
      %v1470 = vpack.c.bf16 %v1452, %v1451
      %v1471 = vpack.c.bf16 %v1454, %v1453
      %v1472 = vpack.c.bf16 %v1456, %v1455
      %v1473 = vld [vmem:[%s3] sm:$0xf]
      %v1474 = vld [vmem:[%s4] sm:$0x1]
      %v1476 = vperm.slane %v1474, 0
      %v1479 = vsel %vm1012, %v1457, 0
      %v1482 = vsel %vm1012, %v1458, 0
      %v1485 = vsel %vm1012, %v1459, 0
      %v1488 = vsel %vm1012, %v1460, 0
      %v1491 = vsel %vm1012, %v1461, 0
      %v1494 = vsel %vm1012, %v1462, 0
      %v1497 = vsel %vm1012, %v1463, 0
      %v1500 = vsel %vm1012, %v1464, 0
      %v1503 = vsel %vm1012, %v1465, 0
      %v1506 = vsel %vm1012, %v1466, 0
      %v1509 = vsel %vm1012, %v1467, 0
      %v1512 = vsel %vm1012, %v1468, 0
      %v1515 = vsel %vm1012, %v1469, 0
      %v1518 = vsel %vm1012, %v1470, 0
      %v1521 = vsel %vm1012, %v1471, 0
      %v1524 = vsel %vm1012, %v1472, 0
      %vm1526 = vcmask 1043456
      %v1528 = vsel %vm1526, %v1473, 0
      %1530 = vmatpush.bf16.msra.mxu0 0
      %1531 = vmatpush.bf16.msra.mxu0 0
      %1532 = vmatpush.bf16.msra.mxu0 0
      %1533 = vmatpush.bf16.msra.mxu0 0
      %1534 = vmatpush.bf16.msra.mxu0 0
      %1535 = vmatpush.bf16.msra.mxu0 0
      %1536 = vmatpush.bf16.msra.mxu0 0
      %1537 = vmatpush.bf16.msra.mxu0 %v1528
      %1538 = vmatmul.bf16.gmra.mxu0 %v1479
      %v1539 = vpop.f32.mrf.mxu0
      %v1540 = vadd.f32 %v1476, %v1539
      %v1541 = vpop.f32.mrf.mxu0
      %v1542 = vadd.f32 %v1476, %v1541
      %1543 = vmatmul.bf16.gmra.mxu0 %v1482
      %v1544 = vpop.f32.mrf.mxu0
      %v1545 = vadd.f32 %v1476, %v1544
      %v1546 = vpop.f32.mrf.mxu0
      %v1547 = vadd.f32 %v1476, %v1546
      %1548 = vmatmul.bf16.gmra.mxu0 %v1485
      %v1549 = vpop.f32.mrf.mxu0
      %v1550 = vadd.f32 %v1476, %v1549
      %v1551 = vpop.f32.mrf.mxu0
      %v1552 = vadd.f32 %v1476, %v1551
      %1553 = vmatmul.bf16.gmra.mxu0 %v1488
      %v1554 = vpop.f32.mrf.mxu0
      %v1555 = vadd.f32 %v1476, %v1554
      %v1556 = vpop.f32.mrf.mxu0
      %v1557 = vadd.f32 %v1476, %v1556
      %1558 = vmatmul.bf16.gmra.mxu0 %v1491
      %v1559 = vpop.f32.mrf.mxu0
      %v1560 = vadd.f32 %v1476, %v1559
      %v1561 = vpop.f32.mrf.mxu0
      %v1562 = vadd.f32 %v1476, %v1561
      %1563 = vmatmul.bf16.gmra.mxu0 %v1494
      %v1564 = vpop.f32.mrf.mxu0
      %v1565 = vadd.f32 %v1476, %v1564
      %v1566 = vpop.f32.mrf.mxu0
      %v1567 = vadd.f32 %v1476, %v1566
      %1568 = vmatmul.bf16.gmra.mxu0 %v1497
      %v1569 = vpop.f32.mrf.mxu0
      %v1570 = vadd.f32 %v1476, %v1569
      %v1571 = vpop.f32.mrf.mxu0
      %v1572 = vadd.f32 %v1476, %v1571
      %1573 = vmatmul.bf16.gmra.mxu0 %v1500
      %v1574 = vpop.f32.mrf.mxu0
      %v1575 = vadd.f32 %v1476, %v1574
      %v1576 = vpop.f32.mrf.mxu0
      %v1577 = vadd.f32 %v1476, %v1576
      %1578 = vmatmul.bf16.gmra.mxu0 %v1503
      %v1579 = vpop.f32.mrf.mxu0
      %v1580 = vadd.f32 %v1476, %v1579
      %v1581 = vpop.f32.mrf.mxu0
      %v1582 = vadd.f32 %v1476, %v1581
      %1583 = vmatmul.bf16.gmra.mxu0 %v1506
      %v1584 = vpop.f32.mrf.mxu0
      %v1585 = vadd.f32 %v1476, %v1584
      %v1586 = vpop.f32.mrf.mxu0
      %v1587 = vadd.f32 %v1476, %v1586
      %1588 = vmatmul.bf16.gmra.mxu0 %v1509
      %v1589 = vpop.f32.mrf.mxu0
      %v1590 = vadd.f32 %v1476, %v1589
      %v1591 = vpop.f32.mrf.mxu0
      %v1592 = vadd.f32 %v1476, %v1591
      %1593 = vmatmul.bf16.gmra.mxu0 %v1512
      %v1594 = vpop.f32.mrf.mxu0
      %v1595 = vadd.f32 %v1476, %v1594
      %v1596 = vpop.f32.mrf.mxu0
      %v1597 = vadd.f32 %v1476, %v1596
      %1598 = vmatmul.bf16.gmra.mxu0 %v1515
      %v1599 = vpop.f32.mrf.mxu0
      %v1600 = vadd.f32 %v1476, %v1599
      %v1601 = vpop.f32.mrf.mxu0
      %v1602 = vadd.f32 %v1476, %v1601
      %1603 = vmatmul.bf16.gmra.mxu0 %v1518
      %v1604 = vpop.f32.mrf.mxu0
      %v1605 = vadd.f32 %v1476, %v1604
      %v1606 = vpop.f32.mrf.mxu0
      %v1607 = vadd.f32 %v1476, %v1606
      %1608 = vmatmul.bf16.gmra.mxu0 %v1521
      %v1609 = vpop.f32.mrf.mxu0
      %v1610 = vadd.f32 %v1476, %v1609
      %v1611 = vpop.f32.mrf.mxu0
      %v1612 = vadd.f32 %v1476, %v1611
      %1613 = vmatmul.bf16.gmra.mxu0 %v1524
      %v1614 = vpop.f32.mrf.mxu0
      %v1615 = vadd.f32 %v1476, %v1614
      %v1616 = vpop.f32.mrf.mxu0
      %v1617 = vadd.f32 %v1476, %v1616
      %1618 = vdwg.mxu0
      %1619 = vst.msk [vmem:[%s246] sm:$0xff] %vm1012, %v1540
      %1620 = vst.msk [vmem:[%s246 + $0x8] sm:$0xff] %vm1012, %v1542
      %1621 = vst.msk [vmem:[%s246 + $0x10] sm:$0xff] %vm1012, %v1545
      %1622 = vst.msk [vmem:[%s246 + $0x18] sm:$0xff] %vm1012, %v1547
      %1623 = vst.msk [vmem:[%s246 + $0x20] sm:$0xff] %vm1012, %v1550
      %1624 = vst.msk [vmem:[%s246 + $0x28] sm:$0xff] %vm1012, %v1552
      %1625 = vst.msk [vmem:[%s246 + $0x30] sm:$0xff] %vm1012, %v1555
      %1626 = vst.msk [vmem:[%s246 + $0x38] sm:$0xff] %vm1012, %v1557
      %1627 = vst.msk [vmem:[%s246 + $0x40] sm:$0xff] %vm1012, %v1560
      %1628 = vst.msk [vmem:[%s246 + $0x48] sm:$0xff] %vm1012, %v1562
      %1629 = vst.msk [vmem:[%s246 + $0x50] sm:$0xff] %vm1012, %v1565
      %1630 = vst.msk [vmem:[%s246 + $0x58] sm:$0xff] %vm1012, %v1567
      %1631 = vst.msk [vmem:[%s246 + $0x60] sm:$0xff] %vm1012, %v1570
      %1632 = vst.msk [vmem:[%s246 + $0x68] sm:$0xff] %vm1012, %v1572
      %1633 = vst.msk [vmem:[%s246 + $0x70] sm:$0xff] %vm1012, %v1575
      %1634 = vst.msk [vmem:[%s246 + $0x78] sm:$0xff] %vm1012, %v1577
      %1635 = vst.msk [vmem:[%s246 + $0x80] sm:$0xff] %vm1012, %v1580
      %1636 = vst.msk [vmem:[%s246 + $0x88] sm:$0xff] %vm1012, %v1582
      %1637 = vst.msk [vmem:[%s246 + $0x90] sm:$0xff] %vm1012, %v1585
      %1638 = vst.msk [vmem:[%s246 + $0x98] sm:$0xff] %vm1012, %v1587
      %1639 = vst.msk [vmem:[%s246 + $0xa0] sm:$0xff] %vm1012, %v1590
      %1640 = vst.msk [vmem:[%s246 + $0xa8] sm:$0xff] %vm1012, %v1592
      %1641 = vst.msk [vmem:[%s246 + $0xb0] sm:$0xff] %vm1012, %v1595
      %1642 = vst.msk [vmem:[%s246 + $0xb8] sm:$0xff] %vm1012, %v1597
      %1643 = vst.msk [vmem:[%s246 + $0xc0] sm:$0xff] %vm1012, %v1600
      %1644 = vst.msk [vmem:[%s246 + $0xc8] sm:$0xff] %vm1012, %v1602
      %1645 = vst.msk [vmem:[%s246 + $0xd0] sm:$0xff] %vm1012, %v1605
      %1646 = vst.msk [vmem:[%s246 + $0xd8] sm:$0xff] %vm1012, %v1607
      %1647 = vst.msk [vmem:[%s246 + $0xe0] sm:$0xff] %vm1012, %v1610
      %1648 = vst.msk [vmem:[%s246 + $0xe8] sm:$0xff] %vm1012, %v1612
      %1649 = vst.msk [vmem:[%s246 + $0xf0] sm:$0xff] %vm1012, %v1615
      %1650 = vst.msk [vmem:[%s246 + $0xf8] sm:$0xff] %vm1012, %v1617
      %s1651 = scalar_lea.vmem %s3, 4
      %v1652 = vld [vmem:[%s1651] sm:$0xf]
      %s1653 = scalar_lea.vmem %s4, 1
      %v1654 = vld [vmem:[%s1653] sm:$0x1]
      %v1656 = vperm.slane %v1654, 0
      %v1659 = vsel %vm1526, %v1652, 0
      %1661 = vmatpush.bf16.msra.mxu0 0
      %1662 = vmatpush.bf16.msra.mxu0 0
      %1663 = vmatpush.bf16.msra.mxu0 0
      %1664 = vmatpush.bf16.msra.mxu0 0
      %1665 = vmatpush.bf16.msra.mxu0 0
      %1666 = vmatpush.bf16.msra.mxu0 0
      %1667 = vmatpush.bf16.msra.mxu0 0
      %1668 = vmatpush.bf16.msra.mxu0 %v1659
      %1669 = vmatmul.bf16.gmra.mxu0 %v1479
      %v1670 = vpop.f32.mrf.mxu0
      %v1671 = vadd.f32 %v1656, %v1670
      %v1672 = vpop.f32.mrf.mxu0
      %v1673 = vadd.f32 %v1656, %v1672
      %1674 = vmatmul.bf16.gmra.mxu0 %v1482
      %v1675 = vpop.f32.mrf.mxu0
      %v1676 = vadd.f32 %v1656, %v1675
      %v1677 = vpop.f32.mrf.mxu0
      %v1678 = vadd.f32 %v1656, %v1677
      %1679 = vmatmul.bf16.gmra.mxu0 %v1485
      %v1680 = vpop.f32.mrf.mxu0
      %v1681 = vadd.f32 %v1656, %v1680
      %v1682 = vpop.f32.mrf.mxu0
      %v1683 = vadd.f32 %v1656, %v1682
      %1684 = vmatmul.bf16.gmra.mxu0 %v1488
      %v1685 = vpop.f32.mrf.mxu0
      %v1686 = vadd.f32 %v1656, %v1685
      %v1687 = vpop.f32.mrf.mxu0
      %v1688 = vadd.f32 %v1656, %v1687
      %1689 = vmatmul.bf16.gmra.mxu0 %v1491
      %v1690 = vpop.f32.mrf.mxu0
      %v1691 = vadd.f32 %v1656, %v1690
      %v1692 = vpop.f32.mrf.mxu0
      %v1693 = vadd.f32 %v1656, %v1692
      %1694 = vmatmul.bf16.gmra.mxu0 %v1494
      %v1695 = vpop.f32.mrf.mxu0
      %v1696 = vadd.f32 %v1656, %v1695
      %v1697 = vpop.f32.mrf.mxu0
      %v1698 = vadd.f32 %v1656, %v1697
      %1699 = vmatmul.bf16.gmra.mxu0 %v1497
      %v1700 = vpop.f32.mrf.mxu0
      %v1701 = vadd.f32 %v1656, %v1700
      %v1702 = vpop.f32.mrf.mxu0
      %v1703 = vadd.f32 %v1656, %v1702
      %1704 = vmatmul.bf16.gmra.mxu0 %v1500
      %v1705 = vpop.f32.mrf.mxu0
      %v1706 = vadd.f32 %v1656, %v1705
      %v1707 = vpop.f32.mrf.mxu0
      %v1708 = vadd.f32 %v1656, %v1707
      %1709 = vmatmul.bf16.gmra.mxu0 %v1503
      %v1710 = vpop.f32.mrf.mxu0
      %v1711 = vadd.f32 %v1656, %v1710
      %v1712 = vpop.f32.mrf.mxu0
      %v1713 = vadd.f32 %v1656, %v1712
      %1714 = vmatmul.bf16.gmra.mxu0 %v1506
      %v1715 = vpop.f32.mrf.mxu0
      %v1716 = vadd.f32 %v1656, %v1715
      %v1717 = vpop.f32.mrf.mxu0
      %v1718 = vadd.f32 %v1656, %v1717
      %1719 = vmatmul.bf16.gmra.mxu0 %v1509
      %v1720 = vpop.f32.mrf.mxu0
      %v1721 = vadd.f32 %v1656, %v1720
      %v1722 = vpop.f32.mrf.mxu0
      %v1723 = vadd.f32 %v1656, %v1722
      %1724 = vmatmul.bf16.gmra.mxu0 %v1512
      %v1725 = vpop.f32.mrf.mxu0
      %v1726 = vadd.f32 %v1656, %v1725
      %v1727 = vpop.f32.mrf.mxu0
      %v1728 = vadd.f32 %v1656, %v1727
      %1729 = vmatmul.bf16.gmra.mxu0 %v1515
      %v1730 = vpop.f32.mrf.mxu0
      %v1731 = vadd.f32 %v1656, %v1730
      %v1732 = vpop.f32.mrf.mxu0
      %v1733 = vadd.f32 %v1656, %v1732
      %1734 = vmatmul.bf16.gmra.mxu0 %v1518
      %v1735 = vpop.f32.mrf.mxu0
      %v1736 = vadd.f32 %v1656, %v1735
      %v1737 = vpop.f32.mrf.mxu0
      %v1738 = vadd.f32 %v1656, %v1737
      %1739 = vmatmul.bf16.gmra.mxu0 %v1521
      %v1740 = vpop.f32.mrf.mxu0
      %v1741 = vadd.f32 %v1656, %v1740
      %v1742 = vpop.f32.mrf.mxu0
      %v1743 = vadd.f32 %v1656, %v1742
      %1744 = vmatmul.bf16.gmra.mxu0 %v1524
      %v1745 = vpop.f32.mrf.mxu0
      %v1746 = vadd.f32 %v1656, %v1745
      %v1747 = vpop.f32.mrf.mxu0
      %v1748 = vadd.f32 %v1656, %v1747
      %1749 = vdwg.mxu0
      %s1750 = scalar_lea.vmem %s246, 256
      %1751 = vst.msk [vmem:[%s1750] sm:$0xff] %vm1012, %v1671
      %1752 = vst.msk [vmem:[%s1750 + $0x8] sm:$0xff] %vm1012, %v1673
      %1753 = vst.msk [vmem:[%s1750 + $0x10] sm:$0xff] %vm1012, %v1676
      %1754 = vst.msk [vmem:[%s1750 + $0x18] sm:$0xff] %vm1012, %v1678
      %1755 = vst.msk [vmem:[%s1750 + $0x20] sm:$0xff] %vm1012, %v1681
      %1756 = vst.msk [vmem:[%s1750 + $0x28] sm:$0xff] %vm1012, %v1683
      %1757 = vst.msk [vmem:[%s1750 + $0x30] sm:$0xff] %vm1012, %v1686
      %1758 = vst.msk [vmem:[%s1750 + $0x38] sm:$0xff] %vm1012, %v1688
      %1759 = vst.msk [vmem:[%s1750 + $0x40] sm:$0xff] %vm1012, %v1691
      %1760 = vst.msk [vmem:[%s1750 + $0x48] sm:$0xff] %vm1012, %v1693
      %1761 = vst.msk [vmem:[%s1750 + $0x50] sm:$0xff] %vm1012, %v1696
      %1762 = vst.msk [vmem:[%s1750 + $0x58] sm:$0xff] %vm1012, %v1698
      %1763 = vst.msk [vmem:[%s1750 + $0x60] sm:$0xff] %vm1012, %v1701
      %1764 = vst.msk [vmem:[%s1750 + $0x68] sm:$0xff] %vm1012, %v1703
      %1765 = vst.msk [vmem:[%s1750 + $0x70] sm:$0xff] %vm1012, %v1706
      %1766 = vst.msk [vmem:[%s1750 + $0x78] sm:$0xff] %vm1012, %v1708
      %1767 = vst.msk [vmem:[%s1750 + $0x80] sm:$0xff] %vm1012, %v1711
      %1768 = vst.msk [vmem:[%s1750 + $0x88] sm:$0xff] %vm1012, %v1713
      %1769 = vst.msk [vmem:[%s1750 + $0x90] sm:$0xff] %vm1012, %v1716
      %1770 = vst.msk [vmem:[%s1750 + $0x98] sm:$0xff] %vm1012, %v1718
      %1771 = vst.msk [vmem:[%s1750 + $0xa0] sm:$0xff] %vm1012, %v1721
      %1772 = vst.msk [vmem:[%s1750 + $0xa8] sm:$0xff] %vm1012, %v1723
      %1773 = vst.msk [vmem:[%s1750 + $0xb0] sm:$0xff] %vm1012, %v1726
      %1774 = vst.msk [vmem:[%s1750 + $0xb8] sm:$0xff] %vm1012, %v1728
      %1775 = vst.msk [vmem:[%s1750 + $0xc0] sm:$0xff] %vm1012, %v1731
      %1776 = vst.msk [vmem:[%s1750 + $0xc8] sm:$0xff] %vm1012, %v1733
      %1777 = vst.msk [vmem:[%s1750 + $0xd0] sm:$0xff] %vm1012, %v1736
      %1778 = vst.msk [vmem:[%s1750 + $0xd8] sm:$0xff] %vm1012, %v1738
      %1779 = vst.msk [vmem:[%s1750 + $0xe0] sm:$0xff] %vm1012, %v1741
      %1780 = vst.msk [vmem:[%s1750 + $0xe8] sm:$0xff] %vm1012, %v1743
      %1781 = vst.msk [vmem:[%s1750 + $0xf0] sm:$0xff] %vm1012, %v1746
      %1782 = vst.msk [vmem:[%s1750 + $0xf8] sm:$0xff] %vm1012, %v1748
      %s1783 = scalar_lea.vmem %s3, 8
      %v1784 = vld [vmem:[%s1783] sm:$0xf]
      %s1785 = scalar_lea.vmem %s4, 2
      %v1786 = vld [vmem:[%s1785] sm:$0x1]
      %v1788 = vperm.slane %v1786, 0
      %v1791 = vsel %vm1526, %v1784, 0
      %1793 = vmatpush.bf16.msra.mxu0 0
      %1794 = vmatpush.bf16.msra.mxu0 0
      %1795 = vmatpush.bf16.msra.mxu0 0
      %1796 = vmatpush.bf16.msra.mxu0 0
      %1797 = vmatpush.bf16.msra.mxu0 0
      %1798 = vmatpush.bf16.msra.mxu0 0
      %1799 = vmatpush.bf16.msra.mxu0 0
      %1800 = vmatpush.bf16.msra.mxu0 %v1791
      %1801 = vmatmul.bf16.gmra.mxu0 %v1479
      %v1802 = vpop.f32.mrf.mxu0
      %v1803 = vadd.f32 %v1788, %v1802
      %v1804 = vpop.f32.mrf.mxu0
      %v1805 = vadd.f32 %v1788, %v1804
      %1806 = vmatmul.bf16.gmra.mxu0 %v1482
      %v1807 = vpop.f32.mrf.mxu0
      %v1808 = vadd.f32 %v1788, %v1807
      %v1809 = vpop.f32.mrf.mxu0
      %v1810 = vadd.f32 %v1788, %v1809
      %1811 = vmatmul.bf16.gmra.mxu0 %v1485
      %v1812 = vpop.f32.mrf.mxu0
      %v1813 = vadd.f32 %v1788, %v1812
      %v1814 = vpop.f32.mrf.mxu0
      %v1815 = vadd.f32 %v1788, %v1814
      %1816 = vmatmul.bf16.gmra.mxu0 %v1488
      %v1817 = vpop.f32.mrf.mxu0
      %v1818 = vadd.f32 %v1788, %v1817
      %v1819 = vpop.f32.mrf.mxu0
      %v1820 = vadd.f32 %v1788, %v1819
      %1821 = vmatmul.bf16.gmra.mxu0 %v1491
      %v1822 = vpop.f32.mrf.mxu0
      %v1823 = vadd.f32 %v1788, %v1822
      %v1824 = vpop.f32.mrf.mxu0
      %v1825 = vadd.f32 %v1788, %v1824
      %1826 = vmatmul.bf16.gmra.mxu0 %v1494
      %v1827 = vpop.f32.mrf.mxu0
      %v1828 = vadd.f32 %v1788, %v1827
      %v1829 = vpop.f32.mrf.mxu0
      %v1830 = vadd.f32 %v1788, %v1829
      %1831 = vmatmul.bf16.gmra.mxu0 %v1497
      %v1832 = vpop.f32.mrf.mxu0
      %v1833 = vadd.f32 %v1788, %v1832
      %v1834 = vpop.f32.mrf.mxu0
      %v1835 = vadd.f32 %v1788, %v1834
      %1836 = vmatmul.bf16.gmra.mxu0 %v1500
      %v1837 = vpop.f32.mrf.mxu0
      %v1838 = vadd.f32 %v1788, %v1837
      %v1839 = vpop.f32.mrf.mxu0
      %v1840 = vadd.f32 %v1788, %v1839
      %1841 = vmatmul.bf16.gmra.mxu0 %v1503
      %v1842 = vpop.f32.mrf.mxu0
      %v1843 = vadd.f32 %v1788, %v1842
      %v1844 = vpop.f32.mrf.mxu0
      %v1845 = vadd.f32 %v1788, %v1844
      %1846 = vmatmul.bf16.gmra.mxu0 %v1506
      %v1847 = vpop.f32.mrf.mxu0
      %v1848 = vadd.f32 %v1788, %v1847
      %v1849 = vpop.f32.mrf.mxu0
      %v1850 = vadd.f32 %v1788, %v1849
      %1851 = vmatmul.bf16.gmra.mxu0 %v1509
      %v1852 = vpop.f32.mrf.mxu0
      %v1853 = vadd.f32 %v1788, %v1852
      %v1854 = vpop.f32.mrf.mxu0
      %v1855 = vadd.f32 %v1788, %v1854
      %1856 = vmatmul.bf16.gmra.mxu0 %v1512
      %v1857 = vpop.f32.mrf.mxu0
      %v1858 = vadd.f32 %v1788, %v1857
      %v1859 = vpop.f32.mrf.mxu0
      %v1860 = vadd.f32 %v1788, %v1859
      %1861 = vmatmul.bf16.gmra.mxu0 %v1515
      %v1862 = vpop.f32.mrf.mxu0
      %v1863 = vadd.f32 %v1788, %v1862
      %v1864 = vpop.f32.mrf.mxu0
      %v1865 = vadd.f32 %v1788, %v1864
      %1866 = vmatmul.bf16.gmra.mxu0 %v1518
      %v1867 = vpop.f32.mrf.mxu0
      %v1868 = vadd.f32 %v1788, %v1867
      %v1869 = vpop.f32.mrf.mxu0
      %v1870 = vadd.f32 %v1788, %v1869
      %1871 = vmatmul.bf16.gmra.mxu0 %v1521
      %v1872 = vpop.f32.mrf.mxu0
      %v1873 = vadd.f32 %v1788, %v1872
      %v1874 = vpop.f32.mrf.mxu0
      %v1875 = vadd.f32 %v1788, %v1874
      %1876 = vmatmul.bf16.gmra.mxu0 %v1524
      %v1877 = vpop.f32.mrf.mxu0
      %v1878 = vadd.f32 %v1788, %v1877
      %v1879 = vpop.f32.mrf.mxu0
      %v1880 = vadd.f32 %v1788, %v1879
      %1881 = vdwg.mxu0
      %s1882 = scalar_lea.vmem %s246, 512
      %1883 = vst.msk [vmem:[%s1882] sm:$0xff] %vm1012, %v1803
      %1884 = vst.msk [vmem:[%s1882 + $0x8] sm:$0xff] %vm1012, %v1805
      %1885 = vst.msk [vmem:[%s1882 + $0x10] sm:$0xff] %vm1012, %v1808
      %1886 = vst.msk [vmem:[%s1882 + $0x18] sm:$0xff] %vm1012, %v1810
      %1887 = vst.msk [vmem:[%s1882 + $0x20] sm:$0xff] %vm1012, %v1813
      %1888 = vst.msk [vmem:[%s1882 + $0x28] sm:$0xff] %vm1012, %v1815
      %1889 = vst.msk [vmem:[%s1882 + $0x30] sm:$0xff] %vm1012, %v1818
      %1890 = vst.msk [vmem:[%s1882 + $0x38] sm:$0xff] %vm1012, %v1820
      %1891 = vst.msk [vmem:[%s1882 + $0x40] sm:$0xff] %vm1012, %v1823
      %1892 = vst.msk [vmem:[%s1882 + $0x48] sm:$0xff] %vm1012, %v1825
      %1893 = vst.msk [vmem:[%s1882 + $0x50] sm:$0xff] %vm1012, %v1828
      %1894 = vst.msk [vmem:[%s1882 + $0x58] sm:$0xff] %vm1012, %v1830
      %1895 = vst.msk [vmem:[%s1882 + $0x60] sm:$0xff] %vm1012, %v1833
      %1896 = vst.msk [vmem:[%s1882 + $0x68] sm:$0xff] %vm1012, %v1835
      %1897 = vst.msk [vmem:[%s1882 + $0x70] sm:$0xff] %vm1012, %v1838
      %1898 = vst.msk [vmem:[%s1882 + $0x78] sm:$0xff] %vm1012, %v1840
      %1899 = vst.msk [vmem:[%s1882 + $0x80] sm:$0xff] %vm1012, %v1843
      %1900 = vst.msk [vmem:[%s1882 + $0x88] sm:$0xff] %vm1012, %v1845
      %1901 = vst.msk [vmem:[%s1882 + $0x90] sm:$0xff] %vm1012, %v1848
      %1902 = vst.msk [vmem:[%s1882 + $0x98] sm:$0xff] %vm1012, %v1850
      %1903 = vst.msk [vmem:[%s1882 + $0xa0] sm:$0xff] %vm1012, %v1853
      %1904 = vst.msk [vmem:[%s1882 + $0xa8] sm:$0xff] %vm1012, %v1855
      %1905 = vst.msk [vmem:[%s1882 + $0xb0] sm:$0xff] %vm1012, %v1858
      %1906 = vst.msk [vmem:[%s1882 + $0xb8] sm:$0xff] %vm1012, %v1860
      %1907 = vst.msk [vmem:[%s1882 + $0xc0] sm:$0xff] %vm1012, %v1863
      %1908 = vst.msk [vmem:[%s1882 + $0xc8] sm:$0xff] %vm1012, %v1865
      %1909 = vst.msk [vmem:[%s1882 + $0xd0] sm:$0xff] %vm1012, %v1868
      %1910 = vst.msk [vmem:[%s1882 + $0xd8] sm:$0xff] %vm1012, %v1870
      %1911 = vst.msk [vmem:[%s1882 + $0xe0] sm:$0xff] %vm1012, %v1873
      %1912 = vst.msk [vmem:[%s1882 + $0xe8] sm:$0xff] %vm1012, %v1875
      %1913 = vst.msk [vmem:[%s1882 + $0xf0] sm:$0xff] %vm1012, %v1878
      %1914 = vst.msk [vmem:[%s1882 + $0xf8] sm:$0xff] %vm1012, %v1880
      %s1915 = smul.u32 32, %s21
      %p1916 = scmp.lt.s32.totalorder %s20, 1
      %s1917 = scalar_select %p1916, %s20, 1
      %p1918 = scmp.lt.s32.totalorder %s1915, 31
      %s1919 = scalar_select %p1918, %s1915, 31
      %s1920 = smul.addr %s1917, 96
      %s1921 = sadd.s32 %s1919, %s1920
      %s1922 = smul.addr %s1921, 8
      %s1923 = scalar_lea.vmem %s5, %s1922
      // Predicated region
      $region41: #{tpu_custom_call.1} parent=39 // pred_check
        %p1924 = pneg %p158
      $region42: #{tpu_custom_call.1} parent=39 // pred_check_branch
        %1926 = sbr.rel (%p1924) target = $region44
      $region43: #{tpu_custom_call.1} parent=39 // pred_region
        %s1927 = smul.u32 32, %s21
      $region44: #{tpu_custom_call.1} parent=39 // pred_fallthru
        _
    $region40: #{tpu_custom_call.1} parent=5 // pred_fallthru
      _
    %p1928 = scmp.le.s32.totalorder 2, %s11
    // Predicated region
    $region45: #{tpu_custom_call.1} parent=5 // pred_check
      %p1929 = pneg %p1928
    $region46: #{tpu_custom_call.1} parent=5 // pred_check_branch
      %1931 = sbr.rel (%p1929) target = $region48
    $region47: #{tpu_custom_call.1} parent=5 // pred_region
      %s1932 = ssub.s32 %s11, 2
      // Predicated region
      $region49: #{tpu_custom_call.1} parent=47 // pred_check
        %p1933 = pneg %p164
      $region50: #{tpu_custom_call.1} parent=47 // pred_check_branch
        %1935 = sbr.rel (%p1933) target = $region52
      $region51: #{tpu_custom_call.1} parent=47 // pred_region
        %s1936 = smul.u32 32, %s23
        %p1937 = scmp.lt.s32.totalorder %s22, 1
        %s1938 = scalar_select %p1937, %s22, 1
        %p1939 = scmp.lt.s32.totalorder %s1936, 31
        %s1940 = scalar_select %p1939, %s1936, 31
        %s1941 = smul.addr %s1938, 96
        %s1942 = sadd.s32 %s1940, %s1941
        %s1943 = smul.addr %s1942, 8
        %s1944 = scalar_lea.vmem %s5, %s1943
      $region52: #{tpu_custom_call.1} parent=47 // pred_fallthru
        _
    $region48: #{tpu_custom_call.1} parent=5 // pred_fallthru
      _
  $region6: #{tpu_custom_call.1} parent=0 // loop_footer
    %s15 = sadd.s32 1, %s11
  $region7: #{tpu_custom_call.1} parent=0 // loop_footer_branch
    %10 = sbr.rel target = $region3
  $region8: #{tpu_custom_call.1} parent=0 // loop_exit
    _

</llo_original>
